<compile_context>
chip_gen: v7x
topology: tpu7x:2x2x1
jax: 0.10.0
libtpu: 0.0.40
codegen_flags: <defaults>
</compile_context>

<pallas_src>
import functools

import jax
import jax.numpy as jnp
from jax.experimental import pallas as pl
from jax.experimental.pallas import tpu as pltpu


def _self_attn_kernel(xf_ref, xq_ref, wq_ref, bq_ref, wkv_ref, bkv_ref,
                      gamma_ref, o_ref, kv_ref, *, add: bool, kp: int, co: int,
                      n_valid: int, n_pad: int):
    """One grid step = (batch element b, query tile qi).

    xf_ref  : (1, C, Np) bf16   full token block (channels first) -> K / V
    xq_ref  : (1, C, TQ) f32    query tile of x (f32 kept for the residual)
    wq_ref  : (Kp, C)    bf16   query weight, zero-padded to Kp rows
    bq_ref  : (Kp, 1)    f32    query bias (padded rows 0)
    wkv_ref : (Kp+Cp, C) bf16   [key ; value ; zeros] weights stacked
    bkv_ref : (Kp+Cp, 1) f32    [key ; value ; 1 ; zeros] biases (the 1 builds a
                                "ones" row => row-sum of p in the PV matmul)
    gamma   : (1, 1)     f32
    o_ref   : (1, Co, TQ) f32   output tile (lane-dense last dim)
    kv_ref  : (Kp+Cp, Np) bf16  persistent VMEM scratch holding K|V|ones.
    """
    # ---- K/V projection: once per batch element, reused across query tiles ----
    @pl.when(pl.program_id(1) == 0)
    def _():
        kv = jnp.dot(wkv_ref[...], xf_ref[0],
                     preferred_element_type=jnp.float32) + bkv_ref[...]
        kv_ref[...] = kv.astype(jnp.bfloat16)

    k = kv_ref[:kp, :]                         # (Kp, Np) bf16, padded rows are 0
    v_ext = kv_ref[kp:, :]                     # (Cp, Np) bf16: Co value rows, ones row, 0-pad

    xq_f32 = xq_ref[0]                         # (C, TQ) f32 (residual path)
    xq = xq_f32.astype(jnp.bfloat16)

    # ---- query projection for this tile only ----
    q = jnp.dot(wq_ref[...], xq,
                preferred_element_type=jnp.float32) + bq_ref[...]       # (Kp, TQ)
    # tiny (TQ, Kp) transpose; the Np-sized operands are never transposed.
    q_t = jnp.transpose(q).astype(jnp.bfloat16)

    # energy[i, j] = <q_i, k_j>; zero-padded channel rows contribute exactly 0.
    energy = jnp.dot(q_t, k, preferred_element_type=jnp.float32)        # (TQ, Np)

    if n_valid < n_pad:  # static branch: mask zero-padded key positions
        col = jax.lax.broadcasted_iota(jnp.int32, energy.shape, 1)
        energy = jnp.where(col < n_valid, energy, -1e30)

    # ---- softmax over keys (torch dim=-1); normalization deferred ----
    m = jnp.max(energy, axis=-1, keepdims=True)                         # f32
    p = jnp.exp(energy - m).astype(jnp.bfloat16)                        # (TQ, Np)

    # torch: out = bmm(V, attention^T)  ->  out[o, i] = sum_j v[o, j] * attn[i, j]
    # Un-normalized PV matmul; the "ones" row yields sum_j p[i, j] with f32
    # accumulation, already laid out along lanes like the output.
    out_ext = jax.lax.dot_general(v_ext, p,
                                  dimension_numbers=(((1,), (1,)), ((), ())),
                                  preferred_element_type=jnp.float32)   # (Cp, TQ)
    inv = pl.reciprocal(out_ext[co:co + 1, :], approx=True)             # (1, TQ)
    out = out_ext[:co, :] * inv                                         # (Co, TQ)

    gamma = gamma_ref[0, 0]
    if add:
        o_ref[0] = gamma * out + xq_f32
    else:
        o_ref[0] = gamma * out


def _choose_query_tile(n_pad):
    """Lane-aligned query tile dividing the padded token count."""
    if n_pad <= 512:
        return n_pad
    budget = 8 << 20                      # cap (TQ, Np) f32 energy + p tiles at ~8 MiB
    for tq in (512, 256, 128):
        if n_pad % tq == 0 and 2 * tq * n_pad * 4 <= budget:
            return tq
    return 128


def self_attn_pallas(x_nchw, params, *, add=False):
    """x_nchw: (B, C, W, H) float32, same layout as the PyTorch module input."""
    B, C, W, H = x_nchw.shape
    N = W * H
    wq, bq, wk, bk, wv, bv, gamma = params     # torch layout: (Cout, Cin), (Cout,)
    Cq = wq.shape[0]
    Co = wv.shape[0]
    if add and Co != C:
        raise ValueError("residual add requires out_dim == in_dim")

    # Pad the tiny q/k channel count to a sublane multiple (zero rows -> 0 energy).
    kp = max(8, ((Cq + 7) // 8) * 8)
    # Value rows + one "ones" row (for the deferred softmax denominator), padded to 8.
    co_p = ((Co + 1 + 7) // 8) * 8
    rows = kp + co_p

    # ---- pack weights: bf16 MXU operands, f32 biases added after f32 accumulation ----
    wq_p = jnp.zeros((kp, C), jnp.float32).at[:Cq].set(wq).astype(jnp.bfloat16)
    bq_p = jnp.zeros((kp, 1), jnp.float32).at[:Cq, 0].set(bq)
    wkv_p = (jnp.zeros((rows, C), jnp.float32)
             .at[:Cq].set(wk)
             .at[kp:kp + Co].set(wv)
             .astype(jnp.bfloat16))
    bkv_p = (jnp.zeros((rows, 1), jnp.float32)
             .at[:Cq, 0].set(bk)
             .at[kp:kp + Co, 0].set(bv)
             .at[kp + Co, 0].set(1.0))        # ones row -> per-query sum of p

    # ---- NCHW -> (B, C, Np): reshape + zero-pad tokens to a multiple of 128 ----
    n_pad = ((N + 127) // 128) * 128
    x_cf = x_nchw.reshape(B, C, N)
    if n_pad != N:
        x_cf = jnp.pad(x_cf, ((0, 0), (0, 0), (0, n_pad - N)))
    x_bf = x_cf.astype(jnp.bfloat16)          # full-sequence block fed as bf16

    tq = _choose_query_tile(n_pad)
    n_q_tiles = n_pad // tq

    # Per-step VMEM footprint estimate -> explicit scoped-VMEM limit (v5e default
    # is only 16 MiB); capped at 64 MiB so it stays legal on v7x.
    est = (2 * C * n_pad * 2          # xf bf16 (double-buffered)
           + 2 * C * tq * 4           # xq f32 (double-buffered)
           + rows * n_pad * 2         # kv scratch
           + 2 * tq * n_pad * 4       # energy + p (f32)
           + 2 * Co * tq * 4          # output tile (double-buffered)
           + 8 * rows * C)            # weights / biases
    vmem_limit = int(min(64 << 20, max(2 * est + (4 << 20), 16 << 20)))

    kernel = functools.partial(_self_attn_kernel, add=add, kp=kp, co=Co,
                               n_valid=N, n_pad=n_pad)

    out_cf = pl.pallas_call(
        kernel,
        out_shape=jax.ShapeDtypeStruct((B, Co, n_pad), jnp.float32),
        grid_spec=pltpu.PrefetchScalarGridSpec(
            num_scalar_prefetch=0,
            grid=(B, n_q_tiles),
            in_specs=[
                pl.BlockSpec((1, C, n_pad), lambda b, q: (b, 0, 0)),   # x full (bf16, K/V)
                pl.BlockSpec((1, C, tq), lambda b, q: (b, 0, q)),      # x query tile (f32)
                pl.BlockSpec((kp, C), lambda b, q: (0, 0)),            # Wq   (bf16)
                pl.BlockSpec((kp, 1), lambda b, q: (0, 0)),            # bq
                pl.BlockSpec((rows, C), lambda b, q: (0, 0)),          # Wk|Wv|0 (bf16)
                pl.BlockSpec((rows, 1), lambda b, q: (0, 0)),          # bk|bv|1|0
                pl.BlockSpec((1, 1), lambda b, q: (0, 0)),             # gamma
            ],
            out_specs=pl.BlockSpec((1, Co, tq), lambda b, q: (b, 0, q)),
            scratch_shapes=[pltpu.VMEM((rows, n_pad), jnp.bfloat16)],  # persistent K|V|ones
        ),
        # Batch axis parallel (megacore); query-tile axis MUST be arbitrary since
        # the kv scratch written at q==0 is reused by later q iterations.
        compiler_params=pltpu.CompilerParams(
            dimension_semantics=("parallel", "arbitrary"),
            vmem_limit_bytes=vmem_limit),
    )(x_bf, x_cf, wq_p, bq_p, wkv_p, bkv_p, gamma)

    # Drop token padding, (B, Co, N) -> (B, Co, W, H): pure slice + reshape.
    return out_cf[:, :, :N].reshape(B, Co, W, H)


def self_attn_reference(x_nchw, params, *, add=False):
    """Pure-JAX f32 reference mirroring the PyTorch forward exactly."""
    B, C, W, H = x_nchw.shape
    N = W * H
    wq, bq, wk, bk, wv, bv, gamma = params
    Co = wv.shape[0]

    x_flat = x_nchw.reshape(B, C, N)                                  # (B, C, N)
    q = jnp.einsum('oc,bcn->bon', wq, x_flat) + bq[None, :, None]     # (B, Cq, N)
    k = jnp.einsum('oc,bcn->bon', wk, x_flat) + bk[None, :, None]     # (B, Cq, N)
    v = jnp.einsum('oc,bcn->bon', wv, x_flat) + bv[None, :, None]     # (B, Co, N)

    energy = jnp.einsum('bci,bcj->bij', q, k)                         # (B, N, N)
    attention = jax.nn.softmax(energy, axis=-1)
    out = jnp.einsum('bcn,bin->bci', v, attention)                    # (B, Co, N)
    out = out.reshape(B, Co, W, H)
    g = gamma[0, 0]
    return g * out + x_nchw if add else g * out


def init_params(key, in_dim, out_dim=None, ratio=8, gamma_value=0.0):
    """Deterministic init, conv weights stored in torch layout (Cout, Cin)."""
    if out_dim is None:
        out_dim = in_dim
    cq = in_dim // ratio
    keys = jax.random.split(key, 6)

    def conv_init(kw, kb, cin, cout):
        bound = 1.0 / jnp.sqrt(cin)   # PyTorch Conv2d default init bound (k=1)
        w = jax.random.uniform(kw, (cout, cin), jnp.float32, -bound, bound)
        b = jax.random.uniform(kb, (cout,), jnp.float32, -bound, bound)
        return w, b

    wq, bq = conv_init(keys[0], keys[1], in_dim, cq)
    wk, bk = conv_init(keys[2], keys[3], in_dim, cq)
    wv, bv = conv_init(keys[4], keys[5], in_dim, out_dim)
    gamma = jnp.full((1, 1), gamma_value, jnp.float32)   # nn.Parameter(torch.zeros(1))
    return (wq, bq, wk, bk, wv, bv, gamma)


if __name__ == "__main__":
    key = jax.random.PRNGKey(0)
    kx, kparam, kx2, kx3 = jax.random.split(key, 4)

    # Config A: faithful module init (gamma = 0, add=False), in_dim=32, ratio=8
    # -> Cq=4, out_dim=in_dim, 16x16 spatial -> N=256 (single query tile).
    B, C, W, H = 2, 32, 16, 16
    x = jax.random.normal(kx, (B, C, W, H), jnp.float32)
    params_a = init_params(kparam, in_dim=C, out_dim=C, ratio=8, gamma_value=0.0)
    out_a = jax.block_until_ready(self_attn_pallas(x, params_a, add=False))
    ref_a = self_attn_reference(x, params_a, add=False)
    assert out_a.shape == ref_a.shape
    assert jnp.allclose(out_a, ref_a, atol=3e-2, rtol=3e-2), \
        float(jnp.max(jnp.abs(out_a - ref_a)))

    # Config B: nonzero gamma, no residual (bf16 MXU operands + approx reciprocal
    # loosen numerics vs the f32 reference, hence the 3e-2 tolerance).
    params_b = init_params(kparam, in_dim=C, out_dim=C, ratio=8, gamma_value=0.5)
    out_b = jax.block_until_ready(self_attn_pallas(x, params_b, add=False))
    ref_b = self_attn_reference(x, params_b, add=False)
    assert jnp.allclose(out_b, ref_b, atol=3e-2, rtol=3e-2), \
        float(jnp.max(jnp.abs(out_b - ref_b)))

    # Config C: nonzero gamma + residual add, 32x32 spatial -> N=1024, exercising
    # the query-tiled path (grid=(2,2), TQ=512) and the K/V-scratch reuse.
    params_c = init_params(kparam, in_dim=C, out_dim=C, ratio=8, gamma_value=0.7)
    x2 = jax.random.normal(kx2, (B, C, 32, 32), jnp.float32)
    out_c = jax.block_until_ready(self_attn_pallas(x2, params_c, add=True))
    ref_c = self_attn_reference(x2, params_c, add=True)
    assert jnp.allclose(out_c, ref_c, atol=3e-2, rtol=3e-2), \
        float(jnp.max(jnp.abs(out_c - ref_c)))

    # Config D: non-lane-aligned spatial 20x20 -> N=400 padded to 512, exercising
    # the key-masking path and padded-output slicing.
    x3 = jax.random.normal(kx3, (B, C, 20, 20), jnp.float32)
    out_d = jax.block_until_ready(self_attn_pallas(x3, params_b, add=False))
    ref_d = self_attn_reference(x3, params_b, add=False)
    assert jnp.allclose(out_d, ref_d, atol=3e-2, rtol=3e-2), \
        float(jnp.max(jnp.abs(out_d - ref_d)))

    print("KERNEL_OK")
</pallas_src>

<mosaic_0001>
module attributes {stable_mosaic.version = 11 : i64} {
  func.func @_self_attn_kernel(%arg0: i32, %arg1: i32, %arg2: memref<1x32x256xbf16, #tpu.memory_space<vmem>>, %arg3: memref<1x32x256xf32, #tpu.memory_space<vmem>>, %arg4: memref<8x32xbf16, #tpu.memory_space<vmem>>, %arg5: memref<8x1xf32, #tpu.memory_space<vmem>>, %arg6: memref<48x32xbf16, #tpu.memory_space<vmem>>, %arg7: memref<48x1xf32, #tpu.memory_space<vmem>>, %arg8: memref<1x1xf32, #tpu.memory_space<vmem>>, %arg9: memref<1x32x256xf32, #tpu.memory_space<vmem>>, %arg10: memref<48x256xbf16, #tpu.memory_space<vmem>>) attributes {dimension_semantics = [#tpu.dimension_semantics<parallel>, #tpu.dimension_semantics<arbitrary>], iteration_bounds = array<i64: 2, 1>, scalar_prefetch = 0 : i64, scratch_operands = 1 : i64, tpu.core_type = #tpu.core_type<tc>, window_params = [{transform_indices = @transform_0, window_bounds = array<i64: 1, 32, 256>}, {transform_indices = @transform_1, window_bounds = array<i64: 1, 32, 256>}, {pipeline_mode = #tpu.pipeline_mode<synchronous>, transform_indices = @transform_2, window_bounds = array<i64: 8, 32>}, {pipeline_mode = #tpu.pipeline_mode<synchronous>, transform_indices = @transform_3, window_bounds = array<i64: 8, 1>}, {pipeline_mode = #tpu.pipeline_mode<synchronous>, transform_indices = @transform_4, window_bounds = array<i64: 48, 32>}, {pipeline_mode = #tpu.pipeline_mode<synchronous>, transform_indices = @transform_5, window_bounds = array<i64: 48, 1>}, {pipeline_mode = #tpu.pipeline_mode<synchronous>, transform_indices = @transform_6, window_bounds = array<i64: 1, 1>}, {transform_indices = @transform_7, window_bounds = array<i64: 1, 32, 256>}]} {
    %c0_i32 = arith.constant 0 : i32
    %0 = arith.cmpi eq, %arg1, %c0_i32 : i32
    %1 = arith.extui %0 : i1 to i32
    %c0_i32_0 = arith.constant 0 : i32
    %2 = arith.cmpi ne, %1, %c0_i32_0 : i32
    scf.if %2 {
      %c0_18 = arith.constant 0 : index
      %c0_19 = arith.constant 0 : index
      %35 = vector.load %arg6[%c0_18, %c0_19] : memref<48x32xbf16, #tpu.memory_space<vmem>>, vector<48x32xbf16>
      %c0_20 = arith.constant 0 : index
      %c0_21 = arith.constant 0 : index
      %c0_22 = arith.constant 0 : index
      %36 = vector.load %arg2[%c0_20, %c0_21, %c0_22] : memref<1x32x256xbf16, #tpu.memory_space<vmem>>, vector<1x32x256xbf16>
      %37 = vector.shape_cast %36 : vector<1x32x256xbf16> to vector<32x256xbf16>
      %cst_23 = arith.constant dense<0.000000e+00> : vector<48x256xf32>
      %38 = tpu.matmul %35, %37, %cst_23 {dimension_numbers = #tpu.dot_dimension_numbers<[1], [0], [0], [1], [0, 0, 1, 1], [], []>} : vector<48x32xbf16>, vector<32x256xbf16>, vector<48x256xf32> -> vector<48x256xf32>
      %c0_24 = arith.constant 0 : index
      %c0_25 = arith.constant 0 : index
      %39 = vector.load %arg7[%c0_24, %c0_25] : memref<48x1xf32, #tpu.memory_space<vmem>>, vector<48x1xf32>
      %40 = vector.broadcast %39 : vector<48x1xf32> to vector<48x256xf32>
      %41 = arith.addf %38, %40 : vector<48x256xf32>
      %42 = arith.truncf %41 : vector<48x256xf32> to vector<48x256xbf16>
      %c0_26 = arith.constant 0 : index
      %c0_27 = arith.constant 0 : index
      %43 = vector.load %arg10[%c0_26, %c0_27] : memref<48x256xbf16, #tpu.memory_space<vmem>>, vector<48x256xbf16>
      tpu.vector_store %arg10[%c0_26, %c0_27], %42 {strides = array<i32>} : memref<48x256xbf16, #tpu.memory_space<vmem>>, vector<48x256xbf16>,
    } else {
    }
    %c0 = arith.constant 0 : index
    %c0_1 = arith.constant 0 : index
    %3 = vector.load %arg10[%c0, %c0_1] : memref<48x256xbf16, #tpu.memory_space<vmem>>, vector<8x256xbf16>
    %c8 = arith.constant 8 : index
    %c0_2 = arith.constant 0 : index
    %4 = vector.load %arg10[%c8, %c0_2] : memref<48x256xbf16, #tpu.memory_space<vmem>>, vector<40x256xbf16>
    %c0_3 = arith.constant 0 : index
    %c0_4 = arith.constant 0 : index
    %c0_5 = arith.constant 0 : index
    %5 = vector.load %arg3[%c0_3, %c0_4, %c0_5] : memref<1x32x256xf32, #tpu.memory_space<vmem>>, vector<1x32x256xf32>
    %6 = vector.shape_cast %5 : vector<1x32x256xf32> to vector<32x256xf32>
    %7 = arith.truncf %6 : vector<32x256xf32> to vector<32x256xbf16>
    %c0_6 = arith.constant 0 : index
    %c0_7 = arith.constant 0 : index
    %8 = vector.load %arg4[%c0_6, %c0_7] : memref<8x32xbf16, #tpu.memory_space<vmem>>, vector<8x32xbf16>
    %cst = arith.constant dense<0.000000e+00> : vector<8x256xf32>
    %9 = tpu.matmul %8, %7, %cst {dimension_numbers = #tpu.dot_dimension_numbers<[1], [0], [0], [1], [0, 0, 1, 1], [], []>} : vector<8x32xbf16>, vector<32x256xbf16>, vector<8x256xf32> -> vector<8x256xf32>
    %c0_8 = arith.constant 0 : index
    %c0_9 = arith.constant 0 : index
    %10 = vector.load %arg5[%c0_8, %c0_9] : memref<8x1xf32, #tpu.memory_space<vmem>>, vector<8x1xf32>
    %11 = vector.broadcast %10 : vector<8x1xf32> to vector<8x256xf32>
    %12 = arith.addf %9, %11 : vector<8x256xf32>
    %13 = tpu.transpose %12, [1, 0] : vector<8x256xf32> -> vector<256x8xf32>
    %14 = arith.truncf %13 : vector<256x8xf32> to vector<256x8xbf16>
    %cst_10 = arith.constant dense<0.000000e+00> : vector<256x256xf32>
    %15 = tpu.matmul %14, %3, %cst_10 {dimension_numbers = #tpu.dot_dimension_numbers<[1], [0], [0], [1], [0, 0, 1, 1], [], []>} : vector<256x8xbf16>, vector<8x256xbf16>, vector<256x256xf32> -> vector<256x256xf32>
    %cst_11 = arith.constant dense<0xFF800000> : vector<256xf32>
    %16 = vector.multi_reduction <maximumf>, %15, %cst_11 [1] : vector<256x256xf32> to vector<256xf32>
    %17 = vector.shape_cast %16 : vector<256xf32> to vector<256x1xf32>
    %18 = vector.broadcast %17 : vector<256x1xf32> to vector<256x256xf32>
    %19 = arith.subf %15, %18 : vector<256x256xf32>
    %20 = math.exp %19 : vector<256x256xf32>
    %21 = arith.truncf %20 : vector<256x256xf32> to vector<256x256xbf16>
    %cst_12 = arith.constant dense<0.000000e+00> : vector<40x256xf32>
    %22 = tpu.matmul %4, %21, %cst_12 {dimension_numbers = #tpu.dot_dimension_numbers<[1], [1], [0], [0], [0, 0, 1, 0], [], []>} : vector<40x256xbf16>, vector<256x256xbf16>, vector<40x256xf32> -> vector<40x256xf32>
    %23 = vector.extract_strided_slice %22 {offsets = [32, 0], sizes = [1, 256], strides = [1, 1]} : vector<40x256xf32> to vector<1x256xf32>
    %24 = tpu.reciprocal %23 {approx = true} : vector<1x256xf32> -> vector<1x256xf32>
    %25 = vector.extract_strided_slice %22 {offsets = [0, 0], sizes = [32, 256], strides = [1, 1]} : vector<40x256xf32> to vector<32x256xf32>
    %26 = vector.broadcast %24 : vector<1x256xf32> to vector<32x256xf32>
    %27 = arith.mulf %25, %26 : vector<32x256xf32>
    %c0_13 = arith.constant 0 : index
    %c0_14 = arith.constant 0 : index
    %28 = vector.load %arg8[%c0_13, %c0_14] : memref<1x1xf32, #tpu.memory_space<vmem>>, vector<1x1xf32>
    %29 = vector.extract %28[0, 0] : f32 from vector<1x1xf32>
    %30 = vector.broadcast %29 : f32 to vector<32x256xf32>
    %31 = arith.mulf %30, %27 : vector<32x256xf32>
    %c0_15 = arith.constant 0 : index
    %c0_16 = arith.constant 0 : index
    %c0_17 = arith.constant 0 : index
    %32 = vector.load %arg9[%c0_15, %c0_16, %c0_17] : memref<1x32x256xf32, #tpu.memory_space<vmem>>, vector<1x32x256xf32>
    %33 = vector.shape_cast %32 : vector<1x32x256xf32> to vector<32x256xf32>
    %34 = vector.shape_cast %31 : vector<32x256xf32> to vector<1x32x256xf32>
    tpu.vector_store %arg9[%c0_15, %c0_16, %c0_17], %34 {strides = array<i32>} : memref<1x32x256xf32, #tpu.memory_space<vmem>>, vector<1x32x256xf32>,
    return
  }
  func.func @transform_0(%arg0: i32, %arg1: i32) -> (i32, i32, i32) {
    %c0_i32 = arith.constant 0 : i32
    %c0_i32_0 = arith.constant 0 : i32
    %c0_i32_1 = arith.constant 0 : i32
    return %arg0, %c0_i32, %c0_i32_0 : i32, i32, i32
  }
  func.func @transform_1(%arg0: i32, %arg1: i32) -> (i32, i32, i32) {
    %c0_i32 = arith.constant 0 : i32
    %c0_i32_0 = arith.constant 0 : i32
    return %arg0, %c0_i32, %arg1 : i32, i32, i32
  }
  func.func @transform_2(%arg0: i32, %arg1: i32) -> (i32, i32) {
    %c0_i32 = arith.constant 0 : i32
    %c0_i32_0 = arith.constant 0 : i32
    %c0_i32_1 = arith.constant 0 : i32
    return %c0_i32, %c0_i32_0 : i32, i32
  }
  func.func @transform_3(%arg0: i32, %arg1: i32) -> (i32, i32) {
    %c0_i32 = arith.constant 0 : i32
    %c0_i32_0 = arith.constant 0 : i32
    %c0_i32_1 = arith.constant 0 : i32
    return %c0_i32, %c0_i32_0 : i32, i32
  }
  func.func @transform_4(%arg0: i32, %arg1: i32) -> (i32, i32) {
    %c0_i32 = arith.constant 0 : i32
    %c0_i32_0 = arith.constant 0 : i32
    %c0_i32_1 = arith.constant 0 : i32
    return %c0_i32, %c0_i32_0 : i32, i32
  }
  func.func @transform_5(%arg0: i32, %arg1: i32) -> (i32, i32) {
    %c0_i32 = arith.constant 0 : i32
    %c0_i32_0 = arith.constant 0 : i32
    %c0_i32_1 = arith.constant 0 : i32
    return %c0_i32, %c0_i32_0 : i32, i32
  }
  func.func @transform_6(%arg0: i32, %arg1: i32) -> (i32, i32) {
    %c0_i32 = arith.constant 0 : i32
    %c0_i32_0 = arith.constant 0 : i32
    %c0_i32_1 = arith.constant 0 : i32
    return %c0_i32, %c0_i32_0 : i32, i32
  }
  func.func @transform_7(%arg0: i32, %arg1: i32) -> (i32, i32, i32) {
    %c0_i32 = arith.constant 0 : i32
    %c0_i32_0 = arith.constant 0 : i32
    return %arg0, %c0_i32, %arg1 : i32, i32, i32
  }
}

</mosaic_0001>

<llo_original>
// kernel: tpu_custom_call.1
$region0: #{tpu_custom_call.1}
  #allocation0 [shape = 'u32[]', space=smem, size = 0x4, offset = 0x4, fixed_abs, tag = 'smem constant byte address 0x4 - core index']
  #allocation1 [shape = 'u32[144,128]{1,0:T(1,128)}', space=vmem, size = 0x12000, scoped, tag = 'internal scratch']
  #allocation2 [shape = 'bf16[48,256]{1,0:T(16,128)(2,1)}', space=vmem, size = 0x6000, scoped, tag = 'scratch operand']
  #allocation3 [shape = 'f32[1,1]{1,0:T(1,128)S(1)}', space=vmem, size = 0x200, scoped, tag = 'scoped memory for tpu_custom_call.1']
  %s0 = inlined_call_operand.vmem [shape: bf16[2,32,256], index: 0, kind: input, shape index: {}]
  %s1 = inlined_call_operand.hbm [shape: f32[2,32,256], index: 1, kind: input, shape index: {}]
  %s2 = inlined_call_operand.vmem [shape: bf16[8,32], index: 2, kind: input, shape index: {}]
  %s3 = inlined_call_operand.vmem [shape: f32[8,1], index: 3, kind: input, shape index: {}]
  %s4 = inlined_call_operand.vmem [shape: bf16[48,32], index: 4, kind: input, shape index: {}]
  %s5 = inlined_call_operand.vmem [shape: f32[48,1], index: 5, kind: input, shape index: {}]
  %s6 = inlined_call_operand.<no memory space> [shape: f32[1,1], index: 6, kind: input, shape index: {}]
  %s7 = inlined_call_operand.hbm [shape: f32[2,32,256], index: 7, kind: output, shape index: {}]
  %s8 = sld [smem:[#allocation0]]
  $region69: #{tpu_custom_call.1} parent=0
    _
  %s10 = ssub.s32 1, %s8
  %s11 = scalar_select 0, %s10, %s8
  %v12 = vstv %s6
  %13 = vst [vmem:[#allocation3] sm:$0x1] %v12
  $region1: #{tpu_custom_call.1} parent=0
    #allocation4 [shape = 'u8[65536]{0}', space=vmem, size = 0x10000, scoped, tag = 'input window, operand 1']
    #allocation5 [shape = 's32[2]{0}', space=sflag, size = 0x8, scoped, tag = 'scoped memory for tpu_custom_call.1']
    #allocation6 [shape = 's32[2]{0}', space=sflag, size = 0x8, scoped, tag = 'scoped memory for tpu_custom_call.1']
    #allocation7 [shape = 'u8[65536]{0}', space=vmem, size = 0x10000, scoped, tag = 'output window, operand 0']
    %14 = vsyncpa [#allocation5], 0
    %s15 = scalar_lea.sflag [#allocation5], 1
    %16 = vsyncpa %s15, 0
    %17 = vsyncpa [#allocation6], 0
    %s18 = scalar_lea.sflag [#allocation6], 1
    %19 = vsyncpa %s18, 0
    loop: start=0, step=1, limit=4
    $region2: #{tpu_custom_call.1} parent=1 // loop_pre_header
      _
    $region3: #{tpu_custom_call.1} parent=1 // loop_header
      %s21 = sphi 0, %s25
      %p22 = scmp.ge.s32.totalorder %s21, 4
      %s28 = sphi 0, %s40
      %s29 = sphi 0, %s36
      %s30 = sphi 0, %s28
      %s31 = sphi 0, %s29
      %s32 = sphi 0, %s30
      %s33 = sphi 0, %s31
      %s43 = sphi 0, %s45
      %s46 = sphi 0, %s43
      %s47 = sphi 0, %s46
      %s63 = sphi 0, %s47
      %s71 = sphi 0, %s73
      %s74 = sphi 0, %s71
      %s75 = sphi 0, %s74
      %s91 = sphi 0, %s75
      %s95 = sphi 0, %s95
      %s97 = sphi 0, %s95
      %s98 = sphi 0, %s97
      %s112 = sphi 0, %s98
      %s116 = sphi 0, %s116
      %s118 = sphi 0, %s116
      %s119 = sphi 0, %s118
      %s133 = sphi 0, %s119
      %s137 = sphi 0, %s137
      %s139 = sphi 0, %s137
      %s140 = sphi 0, %s139
      %s154 = sphi 0, %s140
      %s158 = sphi 0, %s158
      %s160 = sphi 0, %s158
      %s161 = sphi 0, %s160
      %s175 = sphi 0, %s161
      %s179 = sphi 0, %s179
      %s181 = sphi 0, %s179
      %s182 = sphi 0, %s181
      %s196 = sphi 0, %s182
      %s204 = sphi 0, %s206
      %s207 = sphi 0, %s204
      %s208 = sphi 0, %s207
      %s224 = sphi 0, %s208
    $region4: #{tpu_custom_call.1} parent=1 // loop_header_branch
      %24 = sbr.rel (%p22) target = $region8
    $region5: #{tpu_custom_call.1} parent=1 // loop_body
      %s26 = ssub.s32 %s21, 1
      %s27 = ssub.s32 %s21, 2
      %s34 = sadd.s32 1, %s29
      %p35 = scmp.ge.s32.totalorder %s34, 1
      %s36 = scalar_select %p35, 0, %s34
      %s37 = sadd.s32 1, %s28
      %s38 = scalar_select %p35, %s37, %s28
      %p39 = scmp.ge.s32.totalorder %s38, 2
      %s40 = scalar_select %p39, 0, %s38
      %s41 = ssub.s32 %s28, %s40
      %p42 = scmp.eq.s32.totalorder %s41, 0
      %s44 = sadd.s32 %s43, 1
      %s45 = scalar_select %p42, %s43, %s44
      %p48 = pneg %p42
      %p49 = scmp.eq.s32.totalorder %s21, 1
      %p50 = por %p48, %p49
      %p51 = scmp.ne.s32.totalorder %s43, %s46
      %p52 = scmp.eq.s32.totalorder %s21, 0
      %p53 = por %p51, %p52
      %p54 = scmp.ne.s32.totalorder %s43, %s46
      %p55 = scmp.eq.s32.totalorder %s26, 1
      %p56 = por %p54, %p55
      %p57 = scmp.ne.s32.totalorder %s46, %s47
      %p58 = scmp.eq.s32.totalorder %s26, 0
      %p59 = por %p57, %p58
      %p60 = scmp.ne.s32.totalorder %s46, %s47
      %p61 = scmp.eq.s32.totalorder %s27, 1
      %p62 = por %p60, %p61
      %p64 = scmp.ne.s32.totalorder %s47, %s63
      %p65 = scmp.eq.s32.totalorder %s27, 0
      %p66 = por %p64, %p65
      %s67 = ssub.s32 %s28, %s40
      %s68 = ssub.s32 %s29, %s36
      %s69 = sor.u32 %s67, %s68
      %p70 = scmp.eq.s32.totalorder %s69, 0
      %s72 = sadd.s32 %s71, 1
      %s73 = scalar_select %p70, %s71, %s72
      %p76 = pneg %p70
      %p77 = scmp.eq.s32.totalorder %s21, 1
      %p78 = por %p76, %p77
      %p79 = scmp.ne.s32.totalorder %s71, %s74
      %p80 = scmp.eq.s32.totalorder %s21, 0
      %p81 = por %p79, %p80
      %p82 = scmp.ne.s32.totalorder %s71, %s74
      %p83 = scmp.eq.s32.totalorder %s26, 1
      %p84 = por %p82, %p83
      %p85 = scmp.ne.s32.totalorder %s74, %s75
      %p86 = scmp.eq.s32.totalorder %s26, 0
      %p87 = por %p85, %p86
      %p88 = scmp.ne.s32.totalorder %s74, %s75
      %p89 = scmp.eq.s32.totalorder %s27, 1
      %p90 = por %p88, %p89
      %p92 = scmp.ne.s32.totalorder %s75, %s91
      %p93 = scmp.eq.s32.totalorder %s27, 0
      %p94 = por %p92, %p93
      %s96 = sadd.s32 %s95, 1
      %p99 = scmp.eq.s32.totalorder %s21, 1
      %p100 = scmp.ne.s32.totalorder %s95, %s97
      %p101 = scmp.eq.s32.totalorder %s21, 0
      %p102 = por %p100, %p101
      %p103 = scmp.ne.s32.totalorder %s95, %s97
      %p104 = scmp.eq.s32.totalorder %s26, 1
      %p105 = por %p103, %p104
      %p106 = scmp.ne.s32.totalorder %s97, %s98
      %p107 = scmp.eq.s32.totalorder %s26, 0
      %p108 = por %p106, %p107
      %p109 = scmp.ne.s32.totalorder %s97, %s98
      %p110 = scmp.eq.s32.totalorder %s27, 1
      %p111 = por %p109, %p110
      %p113 = scmp.ne.s32.totalorder %s98, %s112
      %p114 = scmp.eq.s32.totalorder %s27, 0
      %p115 = por %p113, %p114
      %s117 = sadd.s32 %s116, 1
      %p120 = scmp.eq.s32.totalorder %s21, 1
      %p121 = scmp.ne.s32.totalorder %s116, %s118
      %p122 = scmp.eq.s32.totalorder %s21, 0
      %p123 = por %p121, %p122
      %p124 = scmp.ne.s32.totalorder %s116, %s118
      %p125 = scmp.eq.s32.totalorder %s26, 1
      %p126 = por %p124, %p125
      %p127 = scmp.ne.s32.totalorder %s118, %s119
      %p128 = scmp.eq.s32.totalorder %s26, 0
      %p129 = por %p127, %p128
      %p130 = scmp.ne.s32.totalorder %s118, %s119
      %p131 = scmp.eq.s32.totalorder %s27, 1
      %p132 = por %p130, %p131
      %p134 = scmp.ne.s32.totalorder %s119, %s133
      %p135 = scmp.eq.s32.totalorder %s27, 0
      %p136 = por %p134, %p135
      %s138 = sadd.s32 %s137, 1
      %p141 = scmp.eq.s32.totalorder %s21, 1
      %p142 = scmp.ne.s32.totalorder %s137, %s139
      %p143 = scmp.eq.s32.totalorder %s21, 0
      %p144 = por %p142, %p143
      %p145 = scmp.ne.s32.totalorder %s137, %s139
      %p146 = scmp.eq.s32.totalorder %s26, 1
      %p147 = por %p145, %p146
      %p148 = scmp.ne.s32.totalorder %s139, %s140
      %p149 = scmp.eq.s32.totalorder %s26, 0
      %p150 = por %p148, %p149
      %p151 = scmp.ne.s32.totalorder %s139, %s140
      %p152 = scmp.eq.s32.totalorder %s27, 1
      %p153 = por %p151, %p152
      %p155 = scmp.ne.s32.totalorder %s140, %s154
      %p156 = scmp.eq.s32.totalorder %s27, 0
      %p157 = por %p155, %p156
      %s159 = sadd.s32 %s158, 1
      %p162 = scmp.eq.s32.totalorder %s21, 1
      %p163 = scmp.ne.s32.totalorder %s158, %s160
      %p164 = scmp.eq.s32.totalorder %s21, 0
      %p165 = por %p163, %p164
      %p166 = scmp.ne.s32.totalorder %s158, %s160
      %p167 = scmp.eq.s32.totalorder %s26, 1
      %p168 = por %p166, %p167
      %p169 = scmp.ne.s32.totalorder %s160, %s161
      %p170 = scmp.eq.s32.totalorder %s26, 0
      %p171 = por %p169, %p170
      %p172 = scmp.ne.s32.totalorder %s160, %s161
      %p173 = scmp.eq.s32.totalorder %s27, 1
      %p174 = por %p172, %p173
      %p176 = scmp.ne.s32.totalorder %s161, %s175
      %p177 = scmp.eq.s32.totalorder %s27, 0
      %p178 = por %p176, %p177
      %s180 = sadd.s32 %s179, 1
      %p183 = scmp.eq.s32.totalorder %s21, 1
      %p184 = scmp.ne.s32.totalorder %s179, %s181
      %p185 = scmp.eq.s32.totalorder %s21, 0
      %p186 = por %p184, %p185
      %p187 = scmp.ne.s32.totalorder %s179, %s181
      %p188 = scmp.eq.s32.totalorder %s26, 1
      %p189 = por %p187, %p188
      %p190 = scmp.ne.s32.totalorder %s181, %s182
      %p191 = scmp.eq.s32.totalorder %s26, 0
      %p192 = por %p190, %p191
      %p193 = scmp.ne.s32.totalorder %s181, %s182
      %p194 = scmp.eq.s32.totalorder %s27, 1
      %p195 = por %p193, %p194
      %p197 = scmp.ne.s32.totalorder %s182, %s196
      %p198 = scmp.eq.s32.totalorder %s27, 0
      %p199 = por %p197, %p198
      %s200 = ssub.s32 %s28, %s40
      %s201 = ssub.s32 %s29, %s36
      %s202 = sor.u32 %s200, %s201
      %p203 = scmp.eq.s32.totalorder %s202, 0
      %s205 = sadd.s32 %s204, 1
      %s206 = scalar_select %p203, %s204, %s205
      %p209 = pneg %p203
      %p210 = scmp.eq.s32.totalorder %s21, 1
      %p211 = por %p209, %p210
      %p212 = scmp.ne.s32.totalorder %s204, %s207
      %p213 = scmp.eq.s32.totalorder %s21, 0
      %p214 = por %p212, %p213
      %p215 = scmp.ne.s32.totalorder %s204, %s207
      %p216 = scmp.eq.s32.totalorder %s26, 1
      %p217 = por %p215, %p216
      %p218 = scmp.ne.s32.totalorder %s207, %s208
      %p219 = scmp.eq.s32.totalorder %s26, 0
      %p220 = por %p218, %p219
      %p221 = scmp.ne.s32.totalorder %s207, %s208
      %p222 = scmp.eq.s32.totalorder %s27, 1
      %p223 = por %p221, %p222
      %p225 = scmp.ne.s32.totalorder %s208, %s224
      %p226 = scmp.eq.s32.totalorder %s27, 0
      %p227 = por %p225, %p226
      %p228 = scmp.le.s32.totalorder 1, %s21
      %p229 = scmp.lt.s32.totalorder %s21, 3
      %p230 = pnand %p228, %p229
      %p231 = pneg %p230
      // Predicated region
      $region9: #{tpu_custom_call.1} parent=5 // pred_check
        _
      $region10: #{tpu_custom_call.1} parent=5 // pred_check_branch
        %233 = sbr.rel (%p230) target = $region12
      $region11: #{tpu_custom_call.1} parent=5 // pred_region
        %s234 = ssub.s32 %s21, 1
        // Predicated region
        $region13: #{tpu_custom_call.1} parent=11 // pred_check
          %p235 = pneg %p108
        $region14: #{tpu_custom_call.1} parent=11 // pred_check_branch
          %237 = sbr.rel (%p235) target = $region16
        $region15: #{tpu_custom_call.1} parent=11 // pred_region
          _
        $region16: #{tpu_custom_call.1} parent=11 // pred_fallthru
          _
        // Predicated region
        $region17: #{tpu_custom_call.1} parent=11 // pred_check
          %p238 = pneg %p129
        $region18: #{tpu_custom_call.1} parent=11 // pred_check_branch
          %240 = sbr.rel (%p238) target = $region20
        $region19: #{tpu_custom_call.1} parent=11 // pred_region
          _
        $region20: #{tpu_custom_call.1} parent=11 // pred_fallthru
          _
        // Predicated region
        $region21: #{tpu_custom_call.1} parent=11 // pred_check
          %p241 = pneg %p150
        $region22: #{tpu_custom_call.1} parent=11 // pred_check_branch
          %243 = sbr.rel (%p241) target = $region24
        $region23: #{tpu_custom_call.1} parent=11 // pred_region
          _
        $region24: #{tpu_custom_call.1} parent=11 // pred_fallthru
          _
        // Predicated region
        $region25: #{tpu_custom_call.1} parent=11 // pred_check
          %p244 = pneg %p171
        $region26: #{tpu_custom_call.1} parent=11 // pred_check_branch
          %246 = sbr.rel (%p244) target = $region28
        $region27: #{tpu_custom_call.1} parent=11 // pred_region
          _
        $region28: #{tpu_custom_call.1} parent=11 // pred_fallthru
          _
        // Predicated region
        $region29: #{tpu_custom_call.1} parent=11 // pred_check
          %p247 = pneg %p192
        $region30: #{tpu_custom_call.1} parent=11 // pred_check_branch
          %249 = sbr.rel (%p247) target = $region32
        $region31: #{tpu_custom_call.1} parent=11 // pred_region
          _
        $region32: #{tpu_custom_call.1} parent=11 // pred_fallthru
          _
      $region12: #{tpu_custom_call.1} parent=5 // pred_fallthru
        _
      %p250 = scmp.lt.s32.totalorder %s21, 2
      // Predicated region
      $region33: #{tpu_custom_call.1} parent=5 // pred_check
        %p251 = pneg %p250
      $region34: #{tpu_custom_call.1} parent=5 // pred_check_branch
        %253 = sbr.rel (%p251) target = $region36
      $region35: #{tpu_custom_call.1} parent=5 // pred_region
        // Predicated region
        $region37: #{tpu_custom_call.1} parent=35 // pred_check
          %p254 = pneg %p53
        $region38: #{tpu_custom_call.1} parent=35 // pred_check_branch
          %256 = sbr.rel (%p254) target = $region40
        $region39: #{tpu_custom_call.1} parent=35 // pred_region
          %p257 = scmp.lt.s32.totalorder %s28, 1
          %s258 = scalar_select %p257, %s28, 1
          %s259 = smul.addr %s258, 8
          %s260 = smul.addr %s259, 4
          %s261 = scalar_lea.vmem %s0, %s260
        $region40: #{tpu_custom_call.1} parent=35 // pred_fallthru
          _
        // Predicated region
        $region41: #{tpu_custom_call.1} parent=35 // pred_check
          %p262 = pneg %p81
        $region42: #{tpu_custom_call.1} parent=35 // pred_check_branch
          %264 = sbr.rel (%p262) target = $region44
        $region43: #{tpu_custom_call.1} parent=35 // pred_region
          %s265 = sand.u32 %s71, 1
          %s266 = scalar_lea.sflag [#allocation5], %s265
          %s267 = sand.u32 %s71, 1
          %s268 = smul.addr %s267, 64
          %s269 = scalar_lea.vmem [#allocation4], %s268
          %s270 = smul.u32 2, %s29
          %s272 = ssub.s32 1024, 1024
          %273 = vsyncadd %s266, %s272
          %s274 = smul.addr %s28, 8
          %s275 = sadd.s32 %s270, %s274
          %s276 = smul.addr %s275, 128
          %s277 = scalar_lea.hbm %s1, %s276
          %s278 = sshll.u32 %s269, 4
          %s279 = int_to_ptr.vmem [resolvable:$true] %s278
          %284 = dma.hbm_to_vmem [thread:$0]  %s277, 1024, %s279, %s266, 256, 256, 16
        $region44: #{tpu_custom_call.1} parent=35 // pred_fallthru
          _
      $region36: #{tpu_custom_call.1} parent=5 // pred_fallthru
        _
      %p285 = scmp.le.s32.totalorder 1, %s21
      %p286 = scmp.lt.s32.totalorder %s21, 3
      %p287 = pnand %p285, %p286
      %p288 = pneg %p287
      // Predicated region
      $region45: #{tpu_custom_call.1} parent=5 // pred_check
        _
      $region46: #{tpu_custom_call.1} parent=5 // pred_check_branch
        %290 = sbr.rel (%p287) target = $region48
      $region47: #{tpu_custom_call.1} parent=5 // pred_region
        %s291 = ssub.s32 %s21, 1
        %s292 = sand.u32 %s74, 1
        %s293 = scalar_lea.sflag [#allocation5], %s292
        %s294 = sand.u32 %s74, 1
        %s295 = smul.addr %s294, 64
        %s296 = scalar_lea.vmem [#allocation4], %s295
        // Predicated region
        $region49: #{tpu_custom_call.1} parent=47 // pred_check
          %p297 = pneg %p87
        $region50: #{tpu_custom_call.1} parent=47 // pred_check_branch
          %299 = sbr.rel (%p297) target = $region52
        $region51: #{tpu_custom_call.1} parent=47 // pred_region
          %300 = dma.done %s293, 1024
        $region52: #{tpu_custom_call.1} parent=47 // pred_fallthru
          _
        %p301 = scmp.lt.s32.totalorder %s30, 1
        %s302 = scalar_select %p301, %s30, 1
        %s303 = smul.addr %s302, 8
        %s304 = smul.addr %s303, 4
        %s305 = scalar_lea.vmem %s0, %s304
        %p306 = pneg %p59
        %p307 = pneg %p56
        %s308 = sand.u32 %s74, 1
        %s309 = scalar_lea.sflag [#allocation5], %s308
        %s310 = sand.u32 %s74, 1
        %s311 = smul.addr %s310, 64
        %s312 = scalar_lea.vmem [#allocation4], %s311
        %p313 = pneg %p87
        %p314 = pneg %p84
        %p315 = pneg %p108
        %p316 = pneg %p105
        %p317 = pneg %p129
        %p318 = pneg %p126
        %p319 = pneg %p150
        %p320 = pneg %p147
        %p321 = pneg %p171
        %p322 = pneg %p168
        %p323 = pneg %p192
        %p324 = pneg %p189
        %p325 = pneg %p220
        %p326 = pneg %p217
        %s327 = sand.u32 %s207, 1
        %s328 = scalar_lea.sflag [#allocation6], %s327
        %s329 = sand.u32 %s207, 1
        %s330 = smul.addr %s329, 64
        %s331 = scalar_lea.vmem [#allocation7], %s330
        %p332 = scmp.lt.s32.totalorder %s30, 1
        %s333 = scalar_select %p332, %s30, 1
        %s334 = smul.addr %s333, 8
        %s335 = smul.addr %s334, 4
        %s336 = scalar_lea.vmem %s0, %s335
        %s337 = smul.u32 2, %s31
        %s338 = smul.u32 2, %s31
        %p340 = scmp.eq.s32.totalorder %s31, 0
        // Predicated region
        $region53: #{tpu_custom_call.1} parent=47 // pred_check
          %p341 = pneg %p340
        $region54: #{tpu_custom_call.1} parent=47 // pred_check_branch
          %343 = sbr.rel (%p341) target = $region56
        $region55: #{tpu_custom_call.1} parent=47 // pred_region
          %v344 = vld [vmem:[%s4] sm:$0xf]
          %v345 = vld [vmem:[%s4 + $0x4] sm:$0xf]
          %v346 = vld [vmem:[%s4 + $0x8] sm:$0xf]
          %v347 = vld [vmem:[%s4 + $0xc] sm:$0xf]
          %v348 = vld [vmem:[%s4 + $0x10] sm:$0xf]
          %v349 = vld [vmem:[%s4 + $0x14] sm:$0xf]
          %v350 = vld [vmem:[%s336] sm:$0xff]
          %v351 = vld [vmem:[%s336 + $0x8] sm:$0xff]
          %v352 = vld [vmem:[%s336 + $0x10] sm:$0xff]
          %v353 = vld [vmem:[%s336 + $0x18] sm:$0xff]
          %v354 = vld [vmem:[%s5] sm:$0xff]
          %v355 = vld [vmem:[%s5 + $0x8] sm:$0xff]
          %v356 = vld [vmem:[%s5 + $0x10] sm:$0xff]
          %v357 = vld [vmem:[%s5 + $0x18] sm:$0xff]
          %v358 = vld [vmem:[%s5 + $0x20] sm:$0xff]
          %v359 = vld [vmem:[%s5 + $0x28] sm:$0xff]
          %361 = vset.pattern.permute.xlu0 0
          %362 = vperm.xlu0 %361, %v354
          %v363 = vpop.permute.xlu0 %362
          %366 = vset.pattern.permute.xlu0 0
          %367 = vperm.xlu0 %366, %v355
          %v368 = vpop.permute.xlu0 %367
          %371 = vset.pattern.permute.xlu0 0
          %372 = vperm.xlu0 %371, %v356
          %v373 = vpop.permute.xlu0 %372
          %376 = vset.pattern.permute.xlu0 0
          %377 = vperm.xlu0 %376, %v357
          %v378 = vpop.permute.xlu0 %377
          %381 = vset.pattern.permute.xlu0 0
          %382 = vperm.xlu0 %381, %v358
          %v383 = vpop.permute.xlu0 %382
          %386 = vset.pattern.permute.xlu0 0
          %387 = vperm.xlu0 %386, %v359
          %v388 = vpop.permute.xlu0 %387
          %v396 = vunpack.c.l.b16 %v344
          %v397 = vunpack.c.l.b16 %v345
          %v398 = vunpack.c.l.b16 %v346
          %v399 = vunpack.c.l.b16 %v347
          %v400 = vunpack.c.l.b16 %v348
          %v401 = vunpack.c.l.b16 %v349
          %v402 = vpack.c.b16 %v397, %v396
          %v403 = vpack.c.b16 %v399, %v398
          %v404 = vpack.c.b16 %v401, %v400
          %v409 = vunpack.c.l.b16 %v350
          %v410 = vunpack.c.h.b16 %v350
          %v411 = vunpack.c.l.b16 %v351
          %v412 = vunpack.c.h.b16 %v351
          %v413 = vunpack.c.l.b16 %v352
          %v414 = vunpack.c.h.b16 %v352
          %v415 = vunpack.c.l.b16 %v353
          %v416 = vunpack.c.h.b16 %v353
          %v417 = vpack.c.b16 %v411, %v409
          %v418 = vpack.c.b16 %v412, %v410
          %v419 = vpack.c.b16 %v415, %v413
          %v420 = vpack.c.b16 %v416, %v414
          %vm425 = vcmask 261120
          %v427 = vsel %vm425, %v402, 0
          %v430 = vsel %vm425, %v403, 0
          %v433 = vsel %vm425, %v404, 0
          %435 = vmatprep.subr.bf16.mxu0 %v418
          %436 = vmatpush1.bf16.msra.mxu0 %v417
          %437 = vmatprep.subr.bf16.mxu0 %v420
          %438 = vmatpush1.bf16.msra.mxu0 %v419
          %439 = vmatprep.subr.bf16.mxu0 0
          %440 = vmatpush1.bf16.msra.mxu0 0
          %441 = vmatprep.subr.bf16.mxu0 0
          %442 = vmatpush1.bf16.msra.mxu0 0
          %443 = vmatprep.subr.bf16.mxu0 0
          %444 = vmatpush1.bf16.msra.mxu0 0
          %445 = vmatprep.subr.bf16.mxu0 0
          %446 = vmatpush1.bf16.msra.mxu0 0
          %447 = vmatprep.subr.bf16.mxu0 0
          %448 = vmatpush1.bf16.msra.mxu0 0
          %449 = vmatprep.subr.bf16.mxu0 0
          %450 = vmatpush1.bf16.msra.mxu0 0
          %451 = vmatprep.subr.bf16.mxu0 0
          %452 = vmatpush1.bf16.msra.mxu0 0
          %453 = vmatprep.subr.bf16.mxu0 0
          %454 = vmatpush1.bf16.msra.mxu0 0
          %455 = vmatprep.subr.bf16.mxu0 0
          %456 = vmatpush1.bf16.msra.mxu0 0
          %457 = vmatprep.subr.bf16.mxu0 0
          %458 = vmatpush1.bf16.msra.mxu0 0
          %459 = vmatprep.subr.bf16.mxu0 0
          %460 = vmatpush1.bf16.msra.mxu0 0
          %461 = vmatprep.subr.bf16.mxu0 0
          %462 = vmatpush1.bf16.msra.mxu0 0
          %463 = vmatprep.subr.bf16.mxu0 0
          %464 = vmatpush1.bf16.msra.mxu0 0
          %465 = vmatprep.subr.bf16.mxu0 0
          %466 = vmatpush1.bf16.msra.mxu0 0
          %467 = vmatprep.mubr.bf16.mxu0 0
          %468 = vmatmul.mubr.bf16.gmra.mrb[0].mxu0 %v427
          %v469 = vpop.f32.mrb[0].mxu0
          %v470 = vadd.f32 %v363, %v469
          %v471 = vpop.f32.mrb[0].mxu0
          %v472 = vadd.f32 %v363, %v471
          %v473 = vpop.f32.mrb[0].mxu0
          %v474 = vadd.f32 %v368, %v473
          %v475 = vpop.f32.mrb[0].mxu0
          %v476 = vadd.f32 %v368, %v475
          %477 = vmatprep.mubr.bf16.mxu0 0
          %478 = vmatmul.mubr.bf16.gmra.mrb[0].mxu0 %v430
          %v479 = vpop.f32.mrb[0].mxu0
          %v480 = vadd.f32 %v373, %v479
          %v481 = vpop.f32.mrb[0].mxu0
          %v482 = vadd.f32 %v373, %v481
          %v483 = vpop.f32.mrb[0].mxu0
          %v484 = vadd.f32 %v378, %v483
          %v485 = vpop.f32.mrb[0].mxu0
          %v486 = vadd.f32 %v378, %v485
          %487 = vmatprep.mubr.bf16.mxu0 0
          %488 = vmatmul.mubr.bf16.gmra.mrb[0].mxu0 %v433
          %v489 = vpop.f32.mrb[0].mxu0
          %v490 = vadd.f32 %v383, %v489
          %v491 = vpop.f32.mrb[0].mxu0
          %v492 = vadd.f32 %v383, %v491
          %v493 = vpop.f32.mrb[0].mxu0
          %v494 = vadd.f32 %v388, %v493
          %v495 = vpop.f32.mrb[0].mxu0
          %v496 = vadd.f32 %v388, %v495
          %497 = vdwg.mxu0
          %v498 = vpack.c.bf16 %v474, %v470
          %v499 = vpack.c.bf16 %v476, %v472
          %v500 = vpack.c.bf16 %v484, %v480
          %v501 = vpack.c.bf16 %v486, %v482
          %v502 = vpack.c.bf16 %v494, %v490
          %v503 = vpack.c.bf16 %v496, %v492
          %504 = vst [vmem:[#allocation2] sm:$0xff] %v498
          %505 = vst [vmem:[#allocation2 + $0x8] sm:$0xff] %v499
          %506 = vst [vmem:[#allocation2 + $0x10] sm:$0xff] %v500
          %507 = vst [vmem:[#allocation2 + $0x18] sm:$0xff] %v501
          %508 = vst [vmem:[#allocation2 + $0x20] sm:$0xff] %v502
          %509 = vst [vmem:[#allocation2 + $0x28] sm:$0xff] %v503
        $region56: #{tpu_custom_call.1} parent=47 // pred_fallthru
          _
        %v510 = vld [vmem:[#allocation2] sm:$0xf]
        %v511 = vld [vmem:[#allocation2 + $0x8] sm:$0xf]
        %v512 = vld [vmem:[#allocation2] sm:$0xf0]
        %v513 = vld [vmem:[#allocation2 + $0x8] sm:$0xf0]
        %v514 = vld [vmem:[#allocation2 + $0x10] sm:$0xff]
        %v515 = vld [vmem:[#allocation2 + $0x18] sm:$0xff]
        %v516 = vld [vmem:[#allocation2 + $0x20] sm:$0xff]
        %v517 = vld [vmem:[#allocation2 + $0x28] sm:$0xff]
        %v518 = vld [vmem:[%s296] sm:$0xff]
        %v519 = vld [vmem:[%s296 + $0x8] sm:$0xff]
        %v520 = vld [vmem:[%s296 + $0x10] sm:$0xff]
        %v521 = vld [vmem:[%s296 + $0x18] sm:$0xff]
        %v522 = vld [vmem:[%s296 + $0x20] sm:$0xff]
        %v523 = vld [vmem:[%s296 + $0x28] sm:$0xff]
        %v524 = vld [vmem:[%s296 + $0x30] sm:$0xff]
        %v525 = vld [vmem:[%s296 + $0x38] sm:$0xff]
        %v526 = vpack.c.bf16 %v520, %v518
        %v527 = vpack.c.bf16 %v521, %v519
        %v528 = vpack.c.bf16 %v524, %v522
        %v529 = vpack.c.bf16 %v525, %v523
        %v530 = vld [vmem:[%s2] sm:$0xf]
        %v531 = vld [vmem:[%s3] sm:$0xff]
        %533 = vset.pattern.permute.xlu0 0
        %534 = vperm.xlu0 %533, %v531
        %v535 = vpop.permute.xlu0 %534
        %vm537 = vcmask 261120
        %v539 = vsel %vm537, %v530, 0
        %541 = vmatprep.subr.bf16.mxu0 %v527
        %542 = vmatpush1.bf16.msra.mxu0 %v526
        %543 = vmatprep.subr.bf16.mxu0 %v529
        %544 = vmatpush1.bf16.msra.mxu0 %v528
        %545 = vmatprep.subr.bf16.mxu0 0
        %546 = vmatpush1.bf16.msra.mxu0 0
        %547 = vmatprep.subr.bf16.mxu0 0
        %548 = vmatpush1.bf16.msra.mxu0 0
        %549 = vmatprep.subr.bf16.mxu0 0
        %550 = vmatpush1.bf16.msra.mxu0 0
        %551 = vmatprep.subr.bf16.mxu0 0
        %552 = vmatpush1.bf16.msra.mxu0 0
        %553 = vmatprep.subr.bf16.mxu0 0
        %554 = vmatpush1.bf16.msra.mxu0 0
        %555 = vmatprep.subr.bf16.mxu0 0
        %556 = vmatpush1.bf16.msra.mxu0 0
        %557 = vmatprep.subr.bf16.mxu0 0
        %558 = vmatpush1.bf16.msra.mxu0 0
        %559 = vmatprep.subr.bf16.mxu0 0
        %560 = vmatpush1.bf16.msra.mxu0 0
        %561 = vmatprep.subr.bf16.mxu0 0
        %562 = vmatpush1.bf16.msra.mxu0 0
        %563 = vmatprep.subr.bf16.mxu0 0
        %564 = vmatpush1.bf16.msra.mxu0 0
        %565 = vmatprep.subr.bf16.mxu0 0
        %566 = vmatpush1.bf16.msra.mxu0 0
        %567 = vmatprep.subr.bf16.mxu0 0
        %568 = vmatpush1.bf16.msra.mxu0 0
        %569 = vmatprep.subr.bf16.mxu0 0
        %570 = vmatpush1.bf16.msra.mxu0 0
        %571 = vmatprep.subr.bf16.mxu0 0
        %572 = vmatpush1.bf16.msra.mxu0 0
        %573 = vmatprep.mubr.bf16.mxu0 0
        %574 = vmatmul.mubr.bf16.gmra.mrb[0].mxu0 %v539
        %v575 = vpop.f32.mrb[0].mxu0
        %v576 = vadd.f32 %v535, %v575
        %v577 = vpop.f32.mrb[0].mxu0
        %v578 = vadd.f32 %v535, %v577
        %v579 = vpop.f32.mrb[0].mxu0
        %v580 = vpop.f32.mrb[0].mxu0
        %581 = vdwg.mxu0
        %582 = vxpose.xlu0.b32.start [1/16] %v576, 128
        %583 = vxpose.xlu0.b32.cont [2/16] 0.0, 128
        %584 = vxpose.xlu0.b32.cont [3/16] 0.0, 128
        %585 = vxpose.xlu0.b32.cont [4/16] 0.0, 128
        %586 = vxpose.xlu0.b32.cont [5/16] 0.0, 128
        %587 = vxpose.xlu0.b32.cont [6/16] 0.0, 128
        %588 = vxpose.xlu0.b32.cont [7/16] 0.0, 128
        %589 = vxpose.xlu0.b32.cont [8/16] 0.0, 128
        %590 = vxpose.xlu0.b32.cont [9/16] 0.0, 128
        %591 = vxpose.xlu0.b32.cont [10/16] 0.0, 128
        %592 = vxpose.xlu0.b32.cont [11/16] 0.0, 128
        %593 = vxpose.xlu0.b32.cont [12/16] 0.0, 128
        %594 = vxpose.xlu0.b32.cont [13/16] 0.0, 128
        %595 = vxpose.xlu0.b32.cont [14/16] 0.0, 128
        %596 = vxpose.xlu0.b32.cont [15/16] 0.0, 128
        %597 = vxpose.xlu0.b32.end [16/16] 0.0, 128
        %v598 = vpop.trf.xlu0
        %v599 = vpop.trf.xlu0
        %v600 = vpop.trf.xlu0
        %v601 = vpop.trf.xlu0
        %v602 = vpop.trf.xlu0
        %v603 = vpop.trf.xlu0
        %v604 = vpop.trf.xlu0
        %v605 = vpop.trf.xlu0
        %v606 = vpop.trf.xlu0
        %v607 = vpop.trf.xlu0
        %v608 = vpop.trf.xlu0
        %v609 = vpop.trf.xlu0
        %v610 = vpop.trf.xlu0
        %v611 = vpop.trf.xlu0
        %v612 = vpop.trf.xlu0
        %v613 = vpop.trf.xlu0
        %614 = vxpose.xlu0.b32.start [1/16] %v578, 128
        %615 = vxpose.xlu0.b32.cont [2/16] 0.0, 128
        %616 = vxpose.xlu0.b32.cont [3/16] 0.0, 128
        %617 = vxpose.xlu0.b32.cont [4/16] 0.0, 128
        %618 = vxpose.xlu0.b32.cont [5/16] 0.0, 128
        %619 = vxpose.xlu0.b32.cont [6/16] 0.0, 128
        %620 = vxpose.xlu0.b32.cont [7/16] 0.0, 128
        %621 = vxpose.xlu0.b32.cont [8/16] 0.0, 128
        %622 = vxpose.xlu0.b32.cont [9/16] 0.0, 128
        %623 = vxpose.xlu0.b32.cont [10/16] 0.0, 128
        %624 = vxpose.xlu0.b32.cont [11/16] 0.0, 128
        %625 = vxpose.xlu0.b32.cont [12/16] 0.0, 128
        %626 = vxpose.xlu0.b32.cont [13/16] 0.0, 128
        %627 = vxpose.xlu0.b32.cont [14/16] 0.0, 128
        %628 = vxpose.xlu0.b32.cont [15/16] 0.0, 128
        %629 = vxpose.xlu0.b32.end [16/16] 0.0, 128
        %v630 = vpop.trf.xlu0
        %v631 = vpop.trf.xlu0
        %v632 = vpop.trf.xlu0
        %v633 = vpop.trf.xlu0
        %v634 = vpop.trf.xlu0
        %v635 = vpop.trf.xlu0
        %v636 = vpop.trf.xlu0
        %v637 = vpop.trf.xlu0
        %v638 = vpop.trf.xlu0
        %v639 = vpop.trf.xlu0
        %v640 = vpop.trf.xlu0
        %v641 = vpop.trf.xlu0
        %v642 = vpop.trf.xlu0
        %v643 = vpop.trf.xlu0
        %v644 = vpop.trf.xlu0
        %v645 = vpop.trf.xlu0
        %v646 = vpack.c.bf16 %v599, %v598
        %v647 = vpack.c.bf16 %v601, %v600
        %v648 = vpack.c.bf16 %v603, %v602
        %v649 = vpack.c.bf16 %v605, %v604
        %v650 = vpack.c.bf16 %v607, %v606
        %v651 = vpack.c.bf16 %v609, %v608
        %v652 = vpack.c.bf16 %v611, %v610
        %v653 = vpack.c.bf16 %v613, %v612
        %v654 = vpack.c.bf16 %v631, %v630
        %v655 = vpack.c.bf16 %v633, %v632
        %v656 = vpack.c.bf16 %v635, %v634
        %v657 = vpack.c.bf16 %v637, %v636
        %v658 = vpack.c.bf16 %v639, %v638
        %v659 = vpack.c.bf16 %v641, %v640
        %v660 = vpack.c.bf16 %v643, %v642
        %v661 = vpack.c.bf16 %v645, %v644
        %vm662 = vcmask 64512
        %v664 = vsel %vm662, %v646, 0
        %v667 = vsel %vm662, %v647, 0
        %v670 = vsel %vm662, %v648, 0
        %v673 = vsel %vm662, %v649, 0
        %v676 = vsel %vm662, %v650, 0
        %v679 = vsel %vm662, %v651, 0
        %v682 = vsel %vm662, %v652, 0
        %v685 = vsel %vm662, %v653, 0
        %v688 = vsel %vm662, %v654, 0
        %v691 = vsel %vm662, %v655, 0
        %v694 = vsel %vm662, %v656, 0
        %v697 = vsel %vm662, %v657, 0
        %v700 = vsel %vm662, %v658, 0
        %v703 = vsel %vm662, %v659, 0
        %v706 = vsel %vm662, %v660, 0
        %v709 = vsel %vm662, %v661, 0
        %vm711 = vcmask 1043456
        %v713 = vsel %vm711, %v510, 0
        %v716 = vsel %vm711, %v511, 0
        %718 = vmatprep.subr.bf16.mxu0 %v716
        %719 = vmatpush1.bf16.msra.mxu0 %v713
        %720 = vmatprep.subr.bf16.mxu0 0
        %721 = vmatpush1.bf16.msra.mxu0 0
        %722 = vmatprep.subr.bf16.mxu0 0
        %723 = vmatpush1.bf16.msra.mxu0 0
        %724 = vmatprep.subr.bf16.mxu0 0
        %725 = vmatpush1.bf16.msra.mxu0 0
        %726 = vmatprep.subr.bf16.mxu0 0
        %727 = vmatpush1.bf16.msra.mxu0 0
        %728 = vmatprep.subr.bf16.mxu0 0
        %729 = vmatpush1.bf16.msra.mxu0 0
        %730 = vmatprep.subr.bf16.mxu0 0
        %731 = vmatpush1.bf16.msra.mxu0 0
        %732 = vmatprep.subr.bf16.mxu0 0
        %733 = vmatpush1.bf16.msra.mxu0 0
        %734 = vmatprep.subr.bf16.mxu0 0
        %735 = vmatpush1.bf16.msra.mxu0 0
        %736 = vmatprep.subr.bf16.mxu0 0
        %737 = vmatpush1.bf16.msra.mxu0 0
        %738 = vmatprep.subr.bf16.mxu0 0
        %739 = vmatpush1.bf16.msra.mxu0 0
        %740 = vmatprep.subr.bf16.mxu0 0
        %741 = vmatpush1.bf16.msra.mxu0 0
        %742 = vmatprep.subr.bf16.mxu0 0
        %743 = vmatpush1.bf16.msra.mxu0 0
        %744 = vmatprep.subr.bf16.mxu0 0
        %745 = vmatpush1.bf16.msra.mxu0 0
        %746 = vmatprep.subr.bf16.mxu0 0
        %747 = vmatpush1.bf16.msra.mxu0 0
        %748 = vmatprep.subr.bf16.mxu0 0
        %749 = vmatpush1.bf16.msra.mxu0 0
        %750 = vmatprep.mubr.bf16.mxu0 0
        %751 = vmatmul.mubr.bf16.gmra.mrb[0].mxu0 %v664
        %v752 = vpop.f32.mrb[0].mxu0
        %v753 = vadd.f32 0.0, %v752
        %v754 = vpop.f32.mrb[0].mxu0
        %v755 = vadd.f32 0.0, %v754
        %v756 = vpop.f32.mrb[0].mxu0
        %v757 = vadd.f32 0.0, %v756
        %v758 = vpop.f32.mrb[0].mxu0
        %v759 = vadd.f32 0.0, %v758
        %760 = vmatprep.mubr.bf16.mxu0 0
        %761 = vmatmul.mubr.bf16.gmra.mrb[0].mxu0 %v667
        %v762 = vpop.f32.mrb[0].mxu0
        %v763 = vadd.f32 0.0, %v762
        %v764 = vpop.f32.mrb[0].mxu0
        %v765 = vadd.f32 0.0, %v764
        %v766 = vpop.f32.mrb[0].mxu0
        %v767 = vadd.f32 0.0, %v766
        %v768 = vpop.f32.mrb[0].mxu0
        %v769 = vadd.f32 0.0, %v768
        %770 = vmatprep.mubr.bf16.mxu0 0
        %771 = vmatmul.mubr.bf16.gmra.mrb[0].mxu0 %v670
        %v772 = vpop.f32.mrb[0].mxu0
        %v773 = vadd.f32 0.0, %v772
        %v774 = vpop.f32.mrb[0].mxu0
        %v775 = vadd.f32 0.0, %v774
        %v776 = vpop.f32.mrb[0].mxu0
        %v777 = vadd.f32 0.0, %v776
        %v778 = vpop.f32.mrb[0].mxu0
        %v779 = vadd.f32 0.0, %v778
        %780 = vmatprep.mubr.bf16.mxu0 0
        %781 = vmatmul.mubr.bf16.gmra.mrb[0].mxu0 %v673
        %v782 = vpop.f32.mrb[0].mxu0
        %v783 = vadd.f32 0.0, %v782
        %v784 = vpop.f32.mrb[0].mxu0
        %v785 = vadd.f32 0.0, %v784
        %v786 = vpop.f32.mrb[0].mxu0
        %v787 = vadd.f32 0.0, %v786
        %v788 = vpop.f32.mrb[0].mxu0
        %v789 = vadd.f32 0.0, %v788
        %790 = vmatprep.mubr.bf16.mxu0 0
        %791 = vmatmul.mubr.bf16.gmra.mrb[0].mxu0 %v676
        %v792 = vpop.f32.mrb[0].mxu0
        %v793 = vadd.f32 0.0, %v792
        %v794 = vpop.f32.mrb[0].mxu0
        %v795 = vadd.f32 0.0, %v794
        %v796 = vpop.f32.mrb[0].mxu0
        %v797 = vadd.f32 0.0, %v796
        %v798 = vpop.f32.mrb[0].mxu0
        %v799 = vadd.f32 0.0, %v798
        %800 = vmatprep.mubr.bf16.mxu0 0
        %801 = vmatmul.mubr.bf16.gmra.mrb[0].mxu0 %v679
        %v802 = vpop.f32.mrb[0].mxu0
        %v803 = vadd.f32 0.0, %v802
        %v804 = vpop.f32.mrb[0].mxu0
        %v805 = vadd.f32 0.0, %v804
        %v806 = vpop.f32.mrb[0].mxu0
        %v807 = vadd.f32 0.0, %v806
        %v808 = vpop.f32.mrb[0].mxu0
        %v809 = vadd.f32 0.0, %v808
        %810 = vmatprep.mubr.bf16.mxu0 0
        %811 = vmatmul.mubr.bf16.gmra.mrb[0].mxu0 %v682
        %v812 = vpop.f32.mrb[0].mxu0
        %v813 = vadd.f32 0.0, %v812
        %v814 = vpop.f32.mrb[0].mxu0
        %v815 = vadd.f32 0.0, %v814
        %v816 = vpop.f32.mrb[0].mxu0
        %v817 = vadd.f32 0.0, %v816
        %v818 = vpop.f32.mrb[0].mxu0
        %v819 = vadd.f32 0.0, %v818
        %820 = vmatprep.mubr.bf16.mxu0 0
        %821 = vmatmul.mubr.bf16.gmra.mrb[0].mxu0 %v685
        %v822 = vpop.f32.mrb[0].mxu0
        %v823 = vadd.f32 0.0, %v822
        %v824 = vpop.f32.mrb[0].mxu0
        %v825 = vadd.f32 0.0, %v824
        %v826 = vpop.f32.mrb[0].mxu0
        %v827 = vadd.f32 0.0, %v826
        %v828 = vpop.f32.mrb[0].mxu0
        %v829 = vadd.f32 0.0, %v828
        %830 = vmatprep.mubr.bf16.mxu0 0
        %831 = vmatmul.mubr.bf16.gmra.mrb[0].mxu0 %v688
        %v832 = vpop.f32.mrb[0].mxu0
        %v833 = vadd.f32 0.0, %v832
        %v834 = vpop.f32.mrb[0].mxu0
        %v835 = vadd.f32 0.0, %v834
        %v836 = vpop.f32.mrb[0].mxu0
        %v837 = vadd.f32 0.0, %v836
        %v838 = vpop.f32.mrb[0].mxu0
        %v839 = vadd.f32 0.0, %v838
        %840 = vmatprep.mubr.bf16.mxu0 0
        %841 = vmatmul.mubr.bf16.gmra.mrb[0].mxu0 %v691
        %v842 = vpop.f32.mrb[0].mxu0
        %v843 = vadd.f32 0.0, %v842
        %v844 = vpop.f32.mrb[0].mxu0
        %v845 = vadd.f32 0.0, %v844
        %v846 = vpop.f32.mrb[0].mxu0
        %v847 = vadd.f32 0.0, %v846
        %v848 = vpop.f32.mrb[0].mxu0
        %v849 = vadd.f32 0.0, %v848
        %850 = vmatprep.mubr.bf16.mxu0 0
        %851 = vmatmul.mubr.bf16.gmra.mrb[0].mxu0 %v694
        %v852 = vpop.f32.mrb[0].mxu0
        %v853 = vadd.f32 0.0, %v852
        %v854 = vpop.f32.mrb[0].mxu0
        %v855 = vadd.f32 0.0, %v854
        %v856 = vpop.f32.mrb[0].mxu0
        %v857 = vadd.f32 0.0, %v856
        %v858 = vpop.f32.mrb[0].mxu0
        %v859 = vadd.f32 0.0, %v858
        %860 = vmatprep.mubr.bf16.mxu0 0
        %861 = vmatmul.mubr.bf16.gmra.mrb[0].mxu0 %v697
        %v862 = vpop.f32.mrb[0].mxu0
        %v863 = vadd.f32 0.0, %v862
        %v864 = vpop.f32.mrb[0].mxu0
        %v865 = vadd.f32 0.0, %v864
        %v866 = vpop.f32.mrb[0].mxu0
        %v867 = vadd.f32 0.0, %v866
        %v868 = vpop.f32.mrb[0].mxu0
        %v869 = vadd.f32 0.0, %v868
        %870 = vmatprep.mubr.bf16.mxu0 0
        %871 = vmatmul.mubr.bf16.gmra.mrb[0].mxu0 %v700
        %v872 = vpop.f32.mrb[0].mxu0
        %v873 = vadd.f32 0.0, %v872
        %v874 = vpop.f32.mrb[0].mxu0
        %v875 = vadd.f32 0.0, %v874
        %v876 = vpop.f32.mrb[0].mxu0
        %v877 = vadd.f32 0.0, %v876
        %v878 = vpop.f32.mrb[0].mxu0
        %v879 = vadd.f32 0.0, %v878
        %880 = vmatprep.mubr.bf16.mxu0 0
        %881 = vmatmul.mubr.bf16.gmra.mrb[0].mxu0 %v703
        %v882 = vpop.f32.mrb[0].mxu0
        %v883 = vadd.f32 0.0, %v882
        %v884 = vpop.f32.mrb[0].mxu0
        %v885 = vadd.f32 0.0, %v884
        %v886 = vpop.f32.mrb[0].mxu0
        %v887 = vadd.f32 0.0, %v886
        %v888 = vpop.f32.mrb[0].mxu0
        %v889 = vadd.f32 0.0, %v888
        %890 = vmatprep.mubr.bf16.mxu0 0
        %891 = vmatmul.mubr.bf16.gmra.mrb[0].mxu0 %v706
        %v892 = vpop.f32.mrb[0].mxu0
        %v893 = vadd.f32 0.0, %v892
        %v894 = vpop.f32.mrb[0].mxu0
        %v895 = vadd.f32 0.0, %v894
        %v896 = vpop.f32.mrb[0].mxu0
        %v897 = vadd.f32 0.0, %v896
        %v898 = vpop.f32.mrb[0].mxu0
        %v899 = vadd.f32 0.0, %v898
        %900 = vmatprep.mubr.bf16.mxu0 0
        %901 = vmatmul.mubr.bf16.gmra.mrb[0].mxu0 %v709
        %v902 = vpop.f32.mrb[0].mxu0
        %v903 = vadd.f32 0.0, %v902
        %v904 = vpop.f32.mrb[0].mxu0
        %v905 = vadd.f32 0.0, %v904
        %v906 = vpop.f32.mrb[0].mxu0
        %v907 = vadd.f32 0.0, %v906
        %v908 = vpop.f32.mrb[0].mxu0
        %v909 = vadd.f32 0.0, %v908
        %910 = vdwg.mxu0
        %v911 = vmax.f32 %v753, %v755
        %912 = vmax.xlane.f32.xlu0 %v911
        %v913 = vpop.xlane.xlu0 %912
        %v914 = vmax.f32 %v757, %v759
        %915 = vmax.xlane.f32.xlu0 %v914
        %v916 = vpop.xlane.xlu0 %915
        %v917 = vmax.f32 %v763, %v765
        %918 = vmax.xlane.f32.xlu0 %v917
        %v919 = vpop.xlane.xlu0 %918
        %v920 = vmax.f32 %v767, %v769
        %921 = vmax.xlane.f32.xlu0 %v920
        %v922 = vpop.xlane.xlu0 %921
        %v923 = vmax.f32 %v773, %v775
        %924 = vmax.xlane.f32.xlu0 %v923
        %v925 = vpop.xlane.xlu0 %924
        %v926 = vmax.f32 %v777, %v779
        %927 = vmax.xlane.f32.xlu0 %v926
        %v928 = vpop.xlane.xlu0 %927
        %v929 = vmax.f32 %v783, %v785
        %930 = vmax.xlane.f32.xlu0 %v929
        %v931 = vpop.xlane.xlu0 %930
        %v932 = vmax.f32 %v787, %v789
        %933 = vmax.xlane.f32.xlu0 %v932
        %v934 = vpop.xlane.xlu0 %933
        %v935 = vmax.f32 %v793, %v795
        %936 = vmax.xlane.f32.xlu0 %v935
        %v937 = vpop.xlane.xlu0 %936
        %v938 = vmax.f32 %v797, %v799
        %939 = vmax.xlane.f32.xlu0 %v938
        %v940 = vpop.xlane.xlu0 %939
        %v941 = vmax.f32 %v803, %v805
        %942 = vmax.xlane.f32.xlu0 %v941
        %v943 = vpop.xlane.xlu0 %942
        %v944 = vmax.f32 %v807, %v809
        %945 = vmax.xlane.f32.xlu0 %v944
        %v946 = vpop.xlane.xlu0 %945
        %v947 = vmax.f32 %v813, %v815
        %948 = vmax.xlane.f32.xlu0 %v947
        %v949 = vpop.xlane.xlu0 %948
        %v950 = vmax.f32 %v817, %v819
        %951 = vmax.xlane.f32.xlu0 %v950
        %v952 = vpop.xlane.xlu0 %951
        %v953 = vmax.f32 %v823, %v825
        %954 = vmax.xlane.f32.xlu0 %v953
        %v955 = vpop.xlane.xlu0 %954
        %v956 = vmax.f32 %v827, %v829
        %957 = vmax.xlane.f32.xlu0 %v956
        %v958 = vpop.xlane.xlu0 %957
        %v959 = vmax.f32 %v833, %v835
        %960 = vmax.xlane.f32.xlu0 %v959
        %v961 = vpop.xlane.xlu0 %960
        %v962 = vmax.f32 %v837, %v839
        %963 = vmax.xlane.f32.xlu0 %v962
        %v964 = vpop.xlane.xlu0 %963
        %v965 = vmax.f32 %v843, %v845
        %966 = vmax.xlane.f32.xlu0 %v965
        %v967 = vpop.xlane.xlu0 %966
        %v968 = vmax.f32 %v847, %v849
        %969 = vmax.xlane.f32.xlu0 %v968
        %v970 = vpop.xlane.xlu0 %969
        %v971 = vmax.f32 %v853, %v855
        %972 = vmax.xlane.f32.xlu0 %v971
        %v973 = vpop.xlane.xlu0 %972
        %v974 = vmax.f32 %v857, %v859
        %975 = vmax.xlane.f32.xlu0 %v974
        %v976 = vpop.xlane.xlu0 %975
        %v977 = vmax.f32 %v863, %v865
        %978 = vmax.xlane.f32.xlu0 %v977
        %v979 = vpop.xlane.xlu0 %978
        %v980 = vmax.f32 %v867, %v869
        %981 = vmax.xlane.f32.xlu0 %v980
        %v982 = vpop.xlane.xlu0 %981
        %v983 = vmax.f32 %v873, %v875
        %984 = vmax.xlane.f32.xlu0 %v983
        %v985 = vpop.xlane.xlu0 %984
        %v986 = vmax.f32 %v877, %v879
        %987 = vmax.xlane.f32.xlu0 %v986
        %v988 = vpop.xlane.xlu0 %987
        %v989 = vmax.f32 %v883, %v885
        %990 = vmax.xlane.f32.xlu0 %v989
        %v991 = vpop.xlane.xlu0 %990
        %v992 = vmax.f32 %v887, %v889
        %993 = vmax.xlane.f32.xlu0 %v992
        %v994 = vpop.xlane.xlu0 %993
        %v995 = vmax.f32 %v893, %v895
        %996 = vmax.xlane.f32.xlu0 %v995
        %v997 = vpop.xlane.xlu0 %996
        %v998 = vmax.f32 %v897, %v899
        %999 = vmax.xlane.f32.xlu0 %v998
        %v1000 = vpop.xlane.xlu0 %999
        %v1001 = vmax.f32 %v903, %v905
        %1002 = vmax.xlane.f32.xlu0 %v1001
        %v1003 = vpop.xlane.xlu0 %1002
        %v1004 = vmax.f32 %v907, %v909
        %1005 = vmax.xlane.f32.xlu0 %v1004
        %v1006 = vpop.xlane.xlu0 %1005
        %v1007 = vsub.f32 %v753, %v913
        %v1008 = vsub.f32 %v755, %v913
        %v1009 = vsub.f32 %v757, %v916
        %v1010 = vsub.f32 %v759, %v916
        %v1011 = vsub.f32 %v763, %v919
        %v1012 = vsub.f32 %v765, %v919
        %v1013 = vsub.f32 %v767, %v922
        %v1014 = vsub.f32 %v769, %v922
        %v1015 = vsub.f32 %v773, %v925
        %v1016 = vsub.f32 %v775, %v925
        %v1017 = vsub.f32 %v777, %v928
        %v1018 = vsub.f32 %v779, %v928
        %v1019 = vsub.f32 %v783, %v931
        %v1020 = vsub.f32 %v785, %v931
        %v1021 = vsub.f32 %v787, %v934
        %v1022 = vsub.f32 %v789, %v934
        %v1023 = vsub.f32 %v793, %v937
        %v1024 = vsub.f32 %v795, %v937
        %v1025 = vsub.f32 %v797, %v940
        %v1026 = vsub.f32 %v799, %v940
        %v1027 = vsub.f32 %v803, %v943
        %v1028 = vsub.f32 %v805, %v943
        %v1029 = vsub.f32 %v807, %v946
        %v1030 = vsub.f32 %v809, %v946
        %v1031 = vsub.f32 %v813, %v949
        %v1032 = vsub.f32 %v815, %v949
        %v1033 = vsub.f32 %v817, %v952
        %v1034 = vsub.f32 %v819, %v952
        %v1035 = vsub.f32 %v823, %v955
        %v1036 = vsub.f32 %v825, %v955
        %v1037 = vsub.f32 %v827, %v958
        %v1038 = vsub.f32 %v829, %v958
        %v1039 = vsub.f32 %v833, %v961
        %v1040 = vsub.f32 %v835, %v961
        %v1041 = vsub.f32 %v837, %v964
        %v1042 = vsub.f32 %v839, %v964
        %v1043 = vsub.f32 %v843, %v967
        %v1044 = vsub.f32 %v845, %v967
        %v1045 = vsub.f32 %v847, %v970
        %v1046 = vsub.f32 %v849, %v970
        %v1047 = vsub.f32 %v853, %v973
        %v1048 = vsub.f32 %v855, %v973
        %v1049 = vsub.f32 %v857, %v976
        %v1050 = vsub.f32 %v859, %v976
        %v1051 = vsub.f32 %v863, %v979
        %v1052 = vsub.f32 %v865, %v979
        %v1053 = vsub.f32 %v867, %v982
        %v1054 = vsub.f32 %v869, %v982
        %v1055 = vsub.f32 %v873, %v985
        %v1056 = vsub.f32 %v875, %v985
        %v1057 = vsub.f32 %v877, %v988
        %v1058 = vsub.f32 %v879, %v988
        %v1059 = vsub.f32 %v883, %v991
        %v1060 = vsub.f32 %v885, %v991
        %v1061 = vsub.f32 %v887, %v994
        %v1062 = vsub.f32 %v889, %v994
        %v1063 = vsub.f32 %v893, %v997
        %v1064 = vsub.f32 %v895, %v997
        %v1065 = vsub.f32 %v897, %v1000
        %v1066 = vsub.f32 %v899, %v1000
        %v1067 = vsub.f32 %v903, %v1003
        %v1068 = vsub.f32 %v905, %v1003
        %v1069 = vsub.f32 %v907, %v1006
        %v1070 = vsub.f32 %v909, %v1006
        %v1071 = vmul.f32 %v1007, 1.442695
        %v1072 = vpow.pop %v1071
        %v1073 = vmul.f32 %v1008, 1.442695
        %v1074 = vpow.pop %v1073
        %v1075 = vmul.f32 %v1009, 1.442695
        %v1076 = vpow.pop %v1075
        %v1077 = vmul.f32 %v1010, 1.442695
        %v1078 = vpow.pop %v1077
        %v1079 = vmul.f32 %v1011, 1.442695
        %v1080 = vpow.pop %v1079
        %v1081 = vmul.f32 %v1012, 1.442695
        %v1082 = vpow.pop %v1081
        %v1083 = vmul.f32 %v1013, 1.442695
        %v1084 = vpow.pop %v1083
        %v1085 = vmul.f32 %v1014, 1.442695
        %v1086 = vpow.pop %v1085
        %v1087 = vmul.f32 %v1015, 1.442695
        %v1088 = vpow.pop %v1087
        %v1089 = vmul.f32 %v1016, 1.442695
        %v1090 = vpow.pop %v1089
        %v1091 = vmul.f32 %v1017, 1.442695
        %v1092 = vpow.pop %v1091
        %v1093 = vmul.f32 %v1018, 1.442695
        %v1094 = vpow.pop %v1093
        %v1095 = vmul.f32 %v1019, 1.442695
        %v1096 = vpow.pop %v1095
        %v1097 = vmul.f32 %v1020, 1.442695
        %v1098 = vpow.pop %v1097
        %v1099 = vmul.f32 %v1021, 1.442695
        %v1100 = vpow.pop %v1099
        %v1101 = vmul.f32 %v1022, 1.442695
        %v1102 = vpow.pop %v1101
        %v1103 = vmul.f32 %v1023, 1.442695
        %v1104 = vpow.pop %v1103
        %v1105 = vmul.f32 %v1024, 1.442695
        %v1106 = vpow.pop %v1105
        %v1107 = vmul.f32 %v1025, 1.442695
        %v1108 = vpow.pop %v1107
        %v1109 = vmul.f32 %v1026, 1.442695
        %v1110 = vpow.pop %v1109
        %v1111 = vmul.f32 %v1027, 1.442695
        %v1112 = vpow.pop %v1111
        %v1113 = vmul.f32 %v1028, 1.442695
        %v1114 = vpow.pop %v1113
        %v1115 = vmul.f32 %v1029, 1.442695
        %v1116 = vpow.pop %v1115
        %v1117 = vmul.f32 %v1030, 1.442695
        %v1118 = vpow.pop %v1117
        %v1119 = vmul.f32 %v1031, 1.442695
        %v1120 = vpow.pop %v1119
        %v1121 = vmul.f32 %v1032, 1.442695
        %v1122 = vpow.pop %v1121
        %v1123 = vmul.f32 %v1033, 1.442695
        %v1124 = vpow.pop %v1123
        %v1125 = vmul.f32 %v1034, 1.442695
        %v1126 = vpow.pop %v1125
        %v1127 = vmul.f32 %v1035, 1.442695
        %v1128 = vpow.pop %v1127
        %v1129 = vmul.f32 %v1036, 1.442695
        %v1130 = vpow.pop %v1129
        %v1131 = vmul.f32 %v1037, 1.442695
        %v1132 = vpow.pop %v1131
        %v1133 = vmul.f32 %v1038, 1.442695
        %v1134 = vpow.pop %v1133
        %v1135 = vmul.f32 %v1039, 1.442695
        %v1136 = vpow.pop %v1135
        %v1137 = vmul.f32 %v1040, 1.442695
        %v1138 = vpow.pop %v1137
        %v1139 = vmul.f32 %v1041, 1.442695
        %v1140 = vpow.pop %v1139
        %v1141 = vmul.f32 %v1042, 1.442695
        %v1142 = vpow.pop %v1141
        %v1143 = vmul.f32 %v1043, 1.442695
        %v1144 = vpow.pop %v1143
        %v1145 = vmul.f32 %v1044, 1.442695
        %v1146 = vpow.pop %v1145
        %v1147 = vmul.f32 %v1045, 1.442695
        %v1148 = vpow.pop %v1147
        %v1149 = vmul.f32 %v1046, 1.442695
        %v1150 = vpow.pop %v1149
        %v1151 = vmul.f32 %v1047, 1.442695
        %v1152 = vpow.pop %v1151
        %v1153 = vmul.f32 %v1048, 1.442695
        %v1154 = vpow.pop %v1153
        %v1155 = vmul.f32 %v1049, 1.442695
        %v1156 = vpow.pop %v1155
        %v1157 = vmul.f32 %v1050, 1.442695
        %v1158 = vpow.pop %v1157
        %v1159 = vmul.f32 %v1051, 1.442695
        %v1160 = vpow.pop %v1159
        %v1161 = vmul.f32 %v1052, 1.442695
        %v1162 = vpow.pop %v1161
        %v1163 = vmul.f32 %v1053, 1.442695
        %v1164 = vpow.pop %v1163
        %v1165 = vmul.f32 %v1054, 1.442695
        %v1166 = vpow.pop %v1165
        %v1167 = vmul.f32 %v1055, 1.442695
        %v1168 = vpow.pop %v1167
        %v1169 = vmul.f32 %v1056, 1.442695
        %v1170 = vpow.pop %v1169
        %v1171 = vmul.f32 %v1057, 1.442695
        %v1172 = vpow.pop %v1171
        %v1173 = vmul.f32 %v1058, 1.442695
        %v1174 = vpow.pop %v1173
        %v1175 = vmul.f32 %v1059, 1.442695
        %v1176 = vpow.pop %v1175
        %v1177 = vmul.f32 %v1060, 1.442695
        %v1178 = vpow.pop %v1177
        %v1179 = vmul.f32 %v1061, 1.442695
        %v1180 = vpow.pop %v1179
        %v1181 = vmul.f32 %v1062, 1.442695
        %v1182 = vpow.pop %v1181
        %v1183 = vmul.f32 %v1063, 1.442695
        %v1184 = vpow.pop %v1183
        %v1185 = vmul.f32 %v1064, 1.442695
        %v1186 = vpow.pop %v1185
        %v1187 = vmul.f32 %v1065, 1.442695
        %v1188 = vpow.pop %v1187
        %v1189 = vmul.f32 %v1066, 1.442695
        %v1190 = vpow.pop %v1189
        %v1191 = vmul.f32 %v1067, 1.442695
        %v1192 = vpow.pop %v1191
        %v1193 = vmul.f32 %v1068, 1.442695
        %v1194 = vpow.pop %v1193
        %v1195 = vmul.f32 %v1069, 1.442695
        %v1196 = vpow.pop %v1195
        %v1197 = vmul.f32 %v1070, 1.442695
        %v1198 = vpow.pop %v1197
        %v1199 = vpack.c.bf16 %v1076, %v1072
        %v1200 = vpack.c.bf16 %v1078, %v1074
        %v1201 = vpack.c.bf16 %v1084, %v1080
        %v1202 = vpack.c.bf16 %v1086, %v1082
        %v1203 = vpack.c.bf16 %v1092, %v1088
        %v1204 = vpack.c.bf16 %v1094, %v1090
        %v1205 = vpack.c.bf16 %v1100, %v1096
        %v1206 = vpack.c.bf16 %v1102, %v1098
        %v1207 = vpack.c.bf16 %v1108, %v1104
        %v1208 = vpack.c.bf16 %v1110, %v1106
        %v1209 = vpack.c.bf16 %v1116, %v1112
        %v1210 = vpack.c.bf16 %v1118, %v1114
        %v1211 = vpack.c.bf16 %v1124, %v1120
        %v1212 = vpack.c.bf16 %v1126, %v1122
        %v1213 = vpack.c.bf16 %v1132, %v1128
        %v1214 = vpack.c.bf16 %v1134, %v1130
        %v1215 = vpack.c.bf16 %v1140, %v1136
        %v1216 = vpack.c.bf16 %v1142, %v1138
        %v1217 = vpack.c.bf16 %v1148, %v1144
        %v1218 = vpack.c.bf16 %v1150, %v1146
        %v1219 = vpack.c.bf16 %v1156, %v1152
        %v1220 = vpack.c.bf16 %v1158, %v1154
        %v1221 = vpack.c.bf16 %v1164, %v1160
        %v1222 = vpack.c.bf16 %v1166, %v1162
        %v1223 = vpack.c.bf16 %v1172, %v1168
        %v1224 = vpack.c.bf16 %v1174, %v1170
        %v1225 = vpack.c.bf16 %v1180, %v1176
        %v1226 = vpack.c.bf16 %v1182, %v1178
        %v1227 = vpack.c.bf16 %v1188, %v1184
        %v1228 = vpack.c.bf16 %v1190, %v1186
        %v1229 = vpack.c.bf16 %v1196, %v1192
        %v1230 = vpack.c.bf16 %v1198, %v1194
        %vm1237 = vcmask 1043456
        %v1238 = vrot.slane %v512, 4
        %v1239 = vrot.slane %v514, 4
        %v1240 = vsel %vm1237, %v1238, %v1239
        %v1241 = vrot.slane %v513, 4
        %v1242 = vrot.slane %v515, 4
        %v1243 = vsel %vm1237, %v1241, %v1242
        %v1244 = vrot.slane %v516, 4
        %v1245 = vsel %vm1237, %v1239, %v1244
        %v1246 = vrot.slane %v517, 4
        %v1247 = vsel %vm1237, %v1242, %v1246
        %1254 = vmatprep.subr.bf16.mxu0 %v1200
        %1255 = vmatpush1.bf16.xpose.msra.mxu0 %v1199
        %1256 = vmatprep.subr.bf16.mxu0 %v1202
        %1257 = vmatpush1.bf16.xpose.msra.mxu0 %v1201
        %1258 = vmatprep.subr.bf16.mxu0 %v1204
        %1259 = vmatpush1.bf16.xpose.msra.mxu0 %v1203
        %1260 = vmatprep.subr.bf16.mxu0 %v1206
        %1261 = vmatpush1.bf16.xpose.msra.mxu0 %v1205
        %1262 = vmatprep.subr.bf16.mxu0 %v1208
        %1263 = vmatpush1.bf16.xpose.msra.mxu0 %v1207
        %1264 = vmatprep.subr.bf16.mxu0 %v1210
        %1265 = vmatpush1.bf16.xpose.msra.mxu0 %v1209
        %1266 = vmatprep.subr.bf16.mxu0 %v1212
        %1267 = vmatpush1.bf16.xpose.msra.mxu0 %v1211
        %1268 = vmatprep.subr.bf16.mxu0 %v1214
        %1269 = vmatpush1.bf16.xpose.msra.mxu0 %v1213
        %1270 = vmatprep.subr.bf16.mxu0 %v1216
        %1271 = vmatpush1.bf16.xpose.msra.mxu0 %v1215
        %1272 = vmatprep.subr.bf16.mxu0 %v1218
        %1273 = vmatpush1.bf16.xpose.msra.mxu0 %v1217
        %1274 = vmatprep.subr.bf16.mxu0 %v1220
        %1275 = vmatpush1.bf16.xpose.msra.mxu0 %v1219
        %1276 = vmatprep.subr.bf16.mxu0 %v1222
        %1277 = vmatpush1.bf16.xpose.msra.mxu0 %v1221
        %1278 = vmatprep.subr.bf16.mxu0 %v1224
        %1279 = vmatpush1.bf16.xpose.msra.mxu0 %v1223
        %1280 = vmatprep.subr.bf16.mxu0 %v1226
        %1281 = vmatpush1.bf16.xpose.msra.mxu0 %v1225
        %1282 = vmatprep.subr.bf16.mxu0 %v1228
        %1283 = vmatpush1.bf16.xpose.msra.mxu0 %v1227
        %1284 = vmatprep.subr.bf16.mxu0 %v1230
        %1285 = vmatpush1.bf16.xpose.msra.mxu0 %v1229
        %1286 = vmatprep.mubr.bf16.mxu0 %v1243
        %1287 = vmatmul.mubr.bf16.gmra.mrb[0].mxu0 %v1240
        %v1288 = vpop.f32.mrb[0].mxu0
        %v1289 = vadd.f32 0.0, %v1288
        %v1290 = vpop.f32.mrb[0].mxu0
        %v1291 = vadd.f32 0.0, %v1290
        %v1292 = vpop.f32.mrb[0].mxu0
        %v1293 = vadd.f32 0.0, %v1292
        %v1294 = vpop.f32.mrb[0].mxu0
        %v1295 = vadd.f32 0.0, %v1294
        %1296 = vmatprep.mubr.bf16.mxu0 %v1247
        %1297 = vmatmul.mubr.bf16.gmra.mrb[0].mxu0 %v1245
        %v1298 = vpop.f32.mrb[0].mxu0
        %v1299 = vadd.f32 0.0, %v1298
        %v1300 = vpop.f32.mrb[0].mxu0
        %v1301 = vadd.f32 0.0, %v1300
        %v1302 = vpop.f32.mrb[0].mxu0
        %v1303 = vadd.f32 0.0, %v1302
        %v1304 = vpop.f32.mrb[0].mxu0
        %v1305 = vadd.f32 0.0, %v1304
        %1306 = vmatprep.mubr.bf16.mxu0 %v1246
        %1307 = vmatmul.mubr.bf16.gmra.mrb[0].mxu0 %v1244
        %v1308 = vpop.f32.mrb[0].mxu0
        %v1309 = vadd.f32 0.0, %v1308
        %v1310 = vpop.f32.mrb[0].mxu0
        %v1311 = vadd.f32 0.0, %v1310
        %v1312 = vpop.f32.mrb[0].mxu0
        %v1313 = vpop.f32.mrb[0].mxu0
        %1314 = vdwg.mxu0
        %v1315 = vrcp.pop %v1309
        %v1316 = vrcp.pop %v1311
        %v1317 = vlaneseq
        %v1318 = vshrl.u32 %v1317, 7
        %v1319 = vsub.s32 0, %v1318
        %v1320 = vrot.slane %v1315, %v1319
        %v1321 = vlaneseq
        %v1322 = vshrl.u32 %v1321, 7
        %v1323 = vsub.s32 0, %v1322
        %v1324 = vrot.slane %v1316, %v1323
        %v1325 = vmul.f32 %v1289, %v1320
        %v1326 = vmul.f32 %v1291, %v1324
        %v1327 = vmul.f32 %v1293, %v1320
        %v1328 = vmul.f32 %v1295, %v1324
        %v1329 = vmul.f32 %v1299, %v1320
        %v1330 = vmul.f32 %v1301, %v1324
        %v1331 = vmul.f32 %v1303, %v1320
        %v1332 = vmul.f32 %v1305, %v1324
        %v1333 = vld [vmem:[#allocation3] sm:$0x1]
        %s1334 = vtos %v1333
        %v1335 = vstv %s1334
        %v1336 = vmul.f32 %v1335, %v1325
        %v1337 = vmul.f32 %v1335, %v1326
        %v1338 = vmul.f32 %v1335, %v1327
        %v1339 = vmul.f32 %v1335, %v1328
        %v1340 = vmul.f32 %v1335, %v1329
        %v1341 = vmul.f32 %v1335, %v1330
        %v1342 = vmul.f32 %v1335, %v1331
        %v1343 = vmul.f32 %v1335, %v1332
        %1344 = vst [vmem:[%s331] sm:$0xff] %v1336
        %1345 = vst [vmem:[%s331 + $0x8] sm:$0xff] %v1337
        %1346 = vst [vmem:[%s331 + $0x10] sm:$0xff] %v1338
        %1347 = vst [vmem:[%s331 + $0x18] sm:$0xff] %v1339
        %1348 = vst [vmem:[%s331 + $0x20] sm:$0xff] %v1340
        %1349 = vst [vmem:[%s331 + $0x28] sm:$0xff] %v1341
        %1350 = vst [vmem:[%s331 + $0x30] sm:$0xff] %v1342
        %1351 = vst [vmem:[%s331 + $0x38] sm:$0xff] %v1343
        %s1352 = sand.u32 %s207, 1
        %s1353 = scalar_lea.sflag [#allocation6], %s1352
        %s1354 = sand.u32 %s207, 1
        %s1355 = smul.addr %s1354, 64
        %s1356 = scalar_lea.vmem [#allocation7], %s1355
        // Predicated region
        $region57: #{tpu_custom_call.1} parent=47 // pred_check
          %p1357 = pneg %p217
        $region58: #{tpu_custom_call.1} parent=47 // pred_check_branch
          %1359 = sbr.rel (%p1357) target = $region60
        $region59: #{tpu_custom_call.1} parent=47 // pred_region
          %s1360 = smul.u32 2, %s31
          %s1362 = ssub.s32 1024, 1024
          %1363 = vsyncadd %s1353, %s1362
          %s1364 = smul.addr %s30, 8
          %s1365 = sadd.s32 %s1360, %s1364
          %s1366 = smul.addr %s1365, 128
          %s1367 = scalar_lea.hbm %s7, %s1366
          %s1368 = sshll.u32 %s1356, 4
          %s1369 = int_to_ptr.vmem [resolvable:$true] %s1368
          %1374 = dma.vmem_to_hbm [thread:$0]  %s1369, 1024, %s1367, %s1353, 256, 256, 16
        $region60: #{tpu_custom_call.1} parent=47 // pred_fallthru
          _
      $region48: #{tpu_custom_call.1} parent=5 // pred_fallthru
        _
      %p1375 = scmp.le.s32.totalorder 2, %s21
      // Predicated region
      $region61: #{tpu_custom_call.1} parent=5 // pred_check
        %p1376 = pneg %p1375
      $region62: #{tpu_custom_call.1} parent=5 // pred_check_branch
        %1378 = sbr.rel (%p1376) target = $region64
      $region63: #{tpu_custom_call.1} parent=5 // pred_region
        %s1379 = ssub.s32 %s21, 2
        // Predicated region
        $region65: #{tpu_custom_call.1} parent=63 // pred_check
          %p1380 = pneg %p223
        $region66: #{tpu_custom_call.1} parent=63 // pred_check_branch
          %1382 = sbr.rel (%p1380) target = $region68
        $region67: #{tpu_custom_call.1} parent=63 // pred_region
          %s1383 = sand.u32 %s208, 1
          %s1384 = scalar_lea.sflag [#allocation6], %s1383
          %s1385 = sand.u32 %s208, 1
          %s1386 = smul.addr %s1385, 64
          %s1387 = scalar_lea.vmem [#allocation7], %s1386
          %1388 = dma.done %s1384, 1024
        $region68: #{tpu_custom_call.1} parent=63 // pred_fallthru
          _
      $region64: #{tpu_custom_call.1} parent=5 // pred_fallthru
        _
    $region6: #{tpu_custom_call.1} parent=1 // loop_footer
      %s25 = sadd.s32 1, %s21
    $region7: #{tpu_custom_call.1} parent=1 // loop_footer_branch
      %20 = sbr.rel target = $region3
    $region8: #{tpu_custom_call.1} parent=1 // loop_exit
      _
    %1389 = vsyncpa [#allocation5], 1
    %s1390 = scalar_lea.sflag [#allocation5], 1
    %1391 = vsyncpa %s1390, 1
    %1392 = vsyncpa [#allocation6], 1
    %s1393 = scalar_lea.sflag [#allocation6], 1
    %1394 = vsyncpa %s1393, 1

</llo_original>
